<compile_context>
chip_gen: v6e
topology: v6e:2x2x1
jax: 0.10.0
libtpu: 0.0.40
codegen_flags: <defaults>
</compile_context>

<pallas_src>
import functools
import math

import jax
import jax.numpy as jnp
from jax.experimental import pallas as pl
from jax.experimental.pallas import tpu as pltpu


def _mha_kernel(x_ref, wqkv_ref, bqkv_ref, wo_ref, bo_ref, o_ref, acc_ref,
                ctx_ref, *, head_block, d_k, n_groups, weights_resident):
    hg = pl.program_id(1)
    blk_b, S, D = x_ref.shape
    cdt = wqkv_ref.dtype                       # matmul-input dtype (bf16 or f32)
    hd = head_block * d_k

    w_idx = hg if weights_resident else 0
    wqkv = wqkv_ref[w_idx]                     # (D, 3*hd)  [q_grp | k_grp | v_grp]
    wo = wo_ref[w_idx]                         # (hd, D)
    bqkv = bqkv_ref[hg]                        # (1, 3*hd)  bias table is always resident

    # ---- fused head-group QKV projection: one (blk_b*S, D) x (D, 3*hd) matmul.
    x2d = x_ref[...].reshape(blk_b * S, D).astype(cdt)
    qkv = jnp.dot(x2d, wqkv, preferred_element_type=jnp.float32) + bqkv
    qkv = qkv.reshape(blk_b, S, 3 * hd)
    q_g = qkv[:, :, 0 * hd:1 * hd].astype(cdt)      # 1/sqrt(d_k) + bias already folded in
    k_g = qkv[:, :, 1 * hd:2 * hd].astype(cdt)
    v_g = qkv[:, :, 2 * hd:3 * hd].astype(cdt)

    # ---- 2-D additive causal ("subsequent") mask bias, broadcast over batch.
    qi = jax.lax.broadcasted_iota(jnp.int32, (S, S), 0)
    ki = jax.lax.broadcasted_iota(jnp.int32, (S, S), 1)
    mask_bias = jnp.where(ki <= qi, 0.0, -1.0e9).astype(jnp.float32)

    # ---- per-head attention within the group (f32 softmax, deferred normalization).
    for h in range(head_block):                # static unroll over the small head group
        q = q_g[:, :, h * d_k:(h + 1) * d_k]
        k = k_g[:, :, h * d_k:(h + 1) * d_k]
        v = v_g[:, :, h * d_k:(h + 1) * d_k]
        s = jnp.einsum("bqd,bkd->bqk", q, k, preferred_element_type=jnp.float32)
        s = s + mask_bias                      # masked_fill(mask == 0, -1e9)
        s = s - jnp.max(s, axis=-1, keepdims=True)
        p = jnp.exp(s)
        denom = jnp.sum(p, axis=-1, keepdims=True)          # (blk_b, S, 1)
        # TODO(synk): dropout(p_attn) skipped (eval-mode semantics).
        ctx = jnp.einsum("bqk,bkd->bqd", p.astype(cdt), v,
                         preferred_element_type=jnp.float32)
        ctx = ctx * pl.reciprocal(denom, approx=True)        # scale S*d_k, not S*S
        ctx_ref[:, h * d_k:(h + 1) * d_k] = ctx.reshape(blk_b * S, d_k).astype(cdt)

    # ---- this head group's slice of the output projection (K = head_block*d_k).
    partial = jnp.dot(ctx_ref[...], wo, preferred_element_type=jnp.float32)

    @pl.when(hg == 0)
    def _init():
        acc_ref[...] = partial + bo_ref[...]

    @pl.when(hg != 0)
    def _accum():
        acc_ref[...] = acc_ref[...] + partial

    @pl.when(hg == n_groups - 1)
    def _store():
        o_ref[...] = acc_ref[...].reshape(blk_b, S, D).astype(o_ref.dtype)


def _pick_head_block(num_head, d_k):
    """Largest head group with head_block*d_k <= 256, preferring 128-aligned widths."""
    divs = [h for h in range(1, num_head + 1) if num_head % h == 0]
    ok = [h for h in divs if h * d_k <= 256] or [1]
    aligned = [h for h in ok if (h * d_k) % 128 == 0]
    return max(aligned) if aligned else max(ok)


def _vmem_limit_bytes():
    """Generation-aware VMEM limit (v7x ~51 MiB, v5e/v6e ~100 MiB)."""
    try:
        cap = int(pltpu.get_tpu_info().vmem_capacity_bytes)
    except Exception:
        cap = 64 * 1024 * 1024            # conservative (v7x-sized) fallback
    return int(min(cap * 0.8, 100 * 1024 * 1024))


def _pick_block_b(B, S, D, hd, budget, w_step_bytes):
    """Budget-driven batch block: as many rows/step as VMEM allows, >=2 parallel steps."""
    def foot(bb):
        rows = bb * S
        return (5 * rows * D * 4            # x (2x buffered) + out (2x buffered) + f32 acc
                + 2 * rows * 3 * hd * 4     # qkv f32 + compute-dtype copies
                + 2 * bb * S * S * 4        # score / exp transients
                + w_step_bytes)
    divisors = [d for d in range(1, B + 1) if B % d == 0]
    cands = [d for d in divisors if B // d >= 2] or divisors   # keep both v7x TCs busy
    fitting = [d for d in cands if foot(d) <= budget] or [min(cands)]
    big_enough = [d for d in fitting if d * S >= 512]          # >=512 rows/step when it fits
    bb = min(big_enough) if big_enough else max(fitting)
    even = [d for d in fitting if (B // d) % 2 == 0]           # prefer even step count
    if (B // bb) % 2 and even:
        bb = min(even, key=lambda d: abs(d - bb))
    return bb


def multi_headed_attention(x, packed, num_head, *, block_b=None):
    """x: (B, S, D). packed: output of pack_params (head-group-blocked weights)."""
    B, S, D = x.shape
    d_k = D // num_head
    wqkv, bqkv, wo, bo = packed["wqkv"], packed["bqkv"], packed["wo"], packed["bo"]
    n_groups = wqkv.shape[0]
    hd = wqkv.shape[2] // 3                    # head_block * d_k
    head_block = hd // d_k
    assert n_groups * head_block == num_head

    cdt = wqkv.dtype
    itemsize = jnp.dtype(cdt).itemsize
    out_dtype = x.dtype

    vmem_limit = _vmem_limit_bytes()
    budget = int(vmem_limit * 0.85)            # headroom for compiler scratch

    group_w_bytes = (D * 3 * hd + hd * D) * itemsize
    total_w_bytes = group_w_bytes * n_groups + bqkv.size * 4 + bo.size * 4
    # Keep weights VMEM-resident (constant index_map -> fetched once) when they fit
    # comfortably (always on v5e/v6e for moderate D; gated by the smaller v7x budget).
    weights_resident = total_w_bytes <= budget // 4
    w_step_bytes = (total_w_bytes if weights_resident
                    else 2 * group_w_bytes + bqkv.size * 4 + bo.size * 4)

    if block_b is None:
        block_b = _pick_block_b(B, S, D, hd, budget, w_step_bytes)
    assert B % block_b == 0

    if weights_resident:
        wqkv_spec = pl.BlockSpec((n_groups, D, 3 * hd), lambda b, g: (0, 0, 0))
        wo_spec = pl.BlockSpec((n_groups, hd, D), lambda b, g: (0, 0, 0))
    else:
        wqkv_spec = pl.BlockSpec((1, D, 3 * hd), lambda b, g: (g, 0, 0))
        wo_spec = pl.BlockSpec((1, hd, D), lambda b, g: (g, 0, 0))

    kernel = functools.partial(_mha_kernel, head_block=head_block, d_k=d_k,
                               n_groups=n_groups, weights_resident=weights_resident)
    grid = (B // block_b, n_groups)            # head-group axis last = accumulation axis

    # Cast x to the matmul dtype at the boundary (halves streamed x bytes for bf16);
    # the kernel output stays in the module's dtype.
    x_in = x.astype(cdt)

    return pl.pallas_call(
        kernel,
        out_shape=jax.ShapeDtypeStruct((B, S, D), out_dtype),
        grid_spec=pltpu.PrefetchScalarGridSpec(
            num_scalar_prefetch=0,
            grid=grid,
            in_specs=[
                pl.BlockSpec((block_b, S, D), lambda b, g: (b, 0, 0)),        # x (resident over g)
                wqkv_spec,                                                    # fused QKV weights
                pl.BlockSpec((n_groups, 1, 3 * hd), lambda b, g: (0, 0, 0)),  # QKV bias (resident)
                wo_spec,                                                      # Wo^T rows per group
                pl.BlockSpec((1, D), lambda b, g: (0, 0)),                    # bo
            ],
            out_specs=pl.BlockSpec((block_b, S, D), lambda b, g: (b, 0, 0)),
            scratch_shapes=[pltpu.VMEM((block_b * S, D), jnp.float32),        # out-proj accumulator
                            pltpu.VMEM((block_b * S, hd), cdt)],              # group ctx staging
        ),
        compiler_params=pltpu.CompilerParams(
            dimension_semantics=("parallel", "arbitrary"),
            vmem_limit_bytes=vmem_limit,
        ),
    )(x_in, wqkv, bqkv, wo, bo)


def pack_params(p, num_head, *, head_block=None, compute_dtype=jnp.bfloat16):
    """Rearrange per-linear transposed weights into the kernel's head-group layout."""
    D = p["wq_t"].shape[0]
    d_k = D // num_head
    if head_block is None:
        head_block = _pick_head_block(num_head, d_k)
    assert num_head % head_block == 0
    ng = num_head // head_block
    hd = head_block * d_k

    scale = 1.0 / math.sqrt(d_k)               # fold 1/sqrt(d_k) into wq / bq (free at pack time)
    wq_t, bq = p["wq_t"] * scale, p["bq"] * scale
    wk_t, bk = p["wk_t"], p["bk"]
    wv_t, bv = p["wv_t"], p["bv"]

    def grp_w(w):                               # (D, D) -> (ng, D, hd), columns grouped by head
        return w.reshape(D, ng, hd).transpose(1, 0, 2)

    def grp_b(b):                               # (1, D) -> (ng, 1, hd)
        return b.reshape(ng, 1, hd)

    wqkv = jnp.concatenate([grp_w(wq_t), grp_w(wk_t), grp_w(wv_t)], axis=2)   # (ng, D, 3*hd)
    bqkv = jnp.concatenate([grp_b(bq), grp_b(bk), grp_b(bv)], axis=2)         # (ng, 1, 3*hd)
    wo = p["wo_t"].reshape(ng, hd, D)                                         # rows grouped by head
    return dict(wqkv=wqkv.astype(compute_dtype),
                bqkv=bqkv.astype(jnp.float32),
                wo=wo.astype(compute_dtype),
                bo=p["bo"].astype(jnp.float32))


def _reference(x, params, num_head):
    """Pure-JAX reference mirroring the PyTorch forward (eval mode)."""
    B, S, D = x.shape
    d_k = D // num_head
    q = x @ params["wq_t"] + params["bq"][0]
    k = x @ params["wk_t"] + params["bk"][0]
    v = x @ params["wv_t"] + params["bv"][0]

    def split(t):                               # (B,S,D) -> (B,H,S,d_k)
        return t.reshape(B, S, num_head, d_k).transpose(0, 2, 1, 3)

    q, k, v = split(q), split(k), split(v)
    scores = jnp.einsum("bhqd,bhkd->bhqk", q, k) / math.sqrt(d_k)
    mask = jnp.tril(jnp.ones((S, S), dtype=bool))
    scores = jnp.where(mask[None, None], scores, -1.0e9)
    p = jax.nn.softmax(scores, axis=-1)
    ctx = jnp.einsum("bhqk,bhkd->bhqd", p, v)
    ctx = ctx.transpose(0, 2, 1, 3).reshape(B, S, D)
    return ctx @ params["wo_t"] + params["bo"][0]


def init_params(key, d_model):
    # Deterministic nn.Linear-style init: U(-1/sqrt(fan_in), 1/sqrt(fan_in)).
    bound = 1.0 / math.sqrt(d_model)
    keys = jax.random.split(key, 8)

    def lin(kw, kb):
        w = jax.random.uniform(kw, (d_model, d_model), jnp.float32, -bound, bound)
        b = jax.random.uniform(kb, (1, d_model), jnp.float32, -bound, bound)
        return w.T, b                           # store transposed: y = x @ Wt + b

    wq_t, bq = lin(keys[0], keys[1])
    wk_t, bk = lin(keys[2], keys[3])
    wv_t, bv = lin(keys[4], keys[5])
    wo_t, bo = lin(keys[6], keys[7])
    return dict(wq_t=wq_t, bq=bq, wk_t=wk_t, bk=bk,
                wv_t=wv_t, bv=bv, wo_t=wo_t, bo=bo)


if __name__ == "__main__":
    B, S, D, H = 2, 8, 32, 4                    # batch, seq_len, d_model, num_head
    key = jax.random.PRNGKey(0)
    kx, kp = jax.random.split(key)
    x = jax.random.normal(kx, (B, S, D), dtype=jnp.float32)
    raw = init_params(kp, D)

    ref = _reference(x, raw, num_head=H)

    # f32 matmul inputs: tight-tolerance check.
    out_f32 = jax.block_until_ready(
        multi_headed_attention(x, pack_params(raw, H, compute_dtype=jnp.float32), num_head=H))
    assert out_f32.shape == (B, S, D)
    assert jnp.allclose(out_f32, ref, atol=1e-2, rtol=1e-2), "f32 kernel mismatch"

    # bf16 matmul inputs (default; MXU-native on v5e/v6e/v7x), f32 softmax/accumulation.
    out_bf16 = jax.block_until_ready(
        multi_headed_attention(x, pack_params(raw, H), num_head=H))
    assert jnp.allclose(out_bf16, ref, atol=5e-2, rtol=5e-2), "bf16 kernel mismatch"

    print("KERNEL_OK")
</pallas_src>

<mosaic_0001>
module attributes {stable_mosaic.version = 11 : i64} {
  func.func @_mha_kernel(%arg0: i32, %arg1: i32, %arg2: memref<1x8x32xf32, #tpu.memory_space<vmem>>, %arg3: memref<1x32x96xf32, #tpu.memory_space<vmem>>, %arg4: memref<1x1x96xf32, #tpu.memory_space<vmem>>, %arg5: memref<1x32x32xf32, #tpu.memory_space<vmem>>, %arg6: memref<1x32xf32, #tpu.memory_space<vmem>>, %arg7: memref<1x8x32xf32, #tpu.memory_space<vmem>>, %arg8: memref<8x32xf32, #tpu.memory_space<vmem>>, %arg9: memref<8x32xf32, #tpu.memory_space<vmem>>) attributes {dimension_semantics = [#tpu.dimension_semantics<parallel>, #tpu.dimension_semantics<arbitrary>], iteration_bounds = array<i64: 2, 1>, scalar_prefetch = 0 : i64, scratch_operands = 2 : i64, tpu.core_type = #tpu.core_type<tc>, window_params = [{transform_indices = @transform_0, window_bounds = array<i64: 1, 8, 32>}, {pipeline_mode = #tpu.pipeline_mode<synchronous>, transform_indices = @transform_1, window_bounds = array<i64: 1, 32, 96>}, {pipeline_mode = #tpu.pipeline_mode<synchronous>, transform_indices = @transform_2, window_bounds = array<i64: 1, 1, 96>}, {pipeline_mode = #tpu.pipeline_mode<synchronous>, transform_indices = @transform_3, window_bounds = array<i64: 1, 32, 32>}, {pipeline_mode = #tpu.pipeline_mode<synchronous>, transform_indices = @transform_4, window_bounds = array<i64: 1, 32>}, {transform_indices = @transform_5, window_bounds = array<i64: 1, 8, 32>}]} {
    %0 = arith.index_cast %arg1 : i32 to index
    %c0 = arith.constant 0 : index
    %c0_0 = arith.constant 0 : index
    %1 = vector.load %arg3[%0, %c0, %c0_0] : memref<1x32x96xf32, #tpu.memory_space<vmem>>, vector<1x32x96xf32>
    %2 = vector.shape_cast %1 : vector<1x32x96xf32> to vector<32x96xf32>
    %3 = arith.index_cast %arg1 : i32 to index
    %c0_1 = arith.constant 0 : index
    %c0_2 = arith.constant 0 : index
    %4 = vector.load %arg5[%3, %c0_1, %c0_2] : memref<1x32x32xf32, #tpu.memory_space<vmem>>, vector<1x32x32xf32>
    %5 = vector.shape_cast %4 : vector<1x32x32xf32> to vector<32x32xf32>
    %6 = arith.index_cast %arg1 : i32 to index
    %c0_3 = arith.constant 0 : index
    %c0_4 = arith.constant 0 : index
    %7 = vector.load %arg4[%6, %c0_3, %c0_4] : memref<1x1x96xf32, #tpu.memory_space<vmem>>, vector<1x1x96xf32>
    %8 = vector.shape_cast %7 : vector<1x1x96xf32> to vector<1x96xf32>
    %c0_5 = arith.constant 0 : index
    %c0_6 = arith.constant 0 : index
    %c0_7 = arith.constant 0 : index
    %9 = vector.load %arg2[%c0_5, %c0_6, %c0_7] : memref<1x8x32xf32, #tpu.memory_space<vmem>>, vector<1x8x32xf32>
    %10 = vector.shape_cast %9 : vector<1x8x32xf32> to vector<8x32xf32>
    %cst = arith.constant dense<0.000000e+00> : vector<8x96xf32>
    %11 = tpu.matmul %10, %2, %cst {dimension_numbers = #tpu.dot_dimension_numbers<[1], [0], [0], [1], [0, 0, 1, 1], [], []>} : vector<8x32xf32>, vector<32x96xf32>, vector<8x96xf32> -> vector<8x96xf32>
    %12 = vector.broadcast %8 : vector<1x96xf32> to vector<8x96xf32>
    %13 = arith.addf %11, %12 : vector<8x96xf32>
    %14 = vector.shape_cast %13 : vector<8x96xf32> to vector<1x8x96xf32>
    %15 = vector.extract_strided_slice %14 {offsets = [0, 0, 0], sizes = [1, 8, 32], strides = [1, 1, 1]} : vector<1x8x96xf32> to vector<1x8x32xf32>
    %16 = vector.extract_strided_slice %14 {offsets = [0, 0, 32], sizes = [1, 8, 32], strides = [1, 1, 1]} : vector<1x8x96xf32> to vector<1x8x32xf32>
    %17 = vector.extract_strided_slice %14 {offsets = [0, 0, 64], sizes = [1, 8, 32], strides = [1, 1, 1]} : vector<1x8x96xf32> to vector<1x8x32xf32>
    %18 = tpu.iota {dimensions = array<i32: 0>} : vector<8x8xi32>
    %19 = tpu.iota {dimensions = array<i32: 1>} : vector<8x8xi32>
    %20 = arith.cmpi sle, %19, %18 : vector<8x8xi32>
    %cst_8 = arith.constant 0.000000e+00 : f32
    %cst_9 = arith.constant -1.000000e+09 : f32
    %21 = vector.broadcast %cst_8 : f32 to vector<8x8xf32>
    %22 = vector.broadcast %cst_9 : f32 to vector<8x8xf32>
    %23 = arith.select %20, %21, %22 : vector<8x8xi1>, vector<8x8xf32>
    %24 = vector.extract_strided_slice %15 {offsets = [0, 0, 0], sizes = [1, 8, 8], strides = [1, 1, 1]} : vector<1x8x32xf32> to vector<1x8x8xf32>
    %25 = vector.extract_strided_slice %16 {offsets = [0, 0, 0], sizes = [1, 8, 8], strides = [1, 1, 1]} : vector<1x8x32xf32> to vector<1x8x8xf32>
    %26 = vector.extract_strided_slice %17 {offsets = [0, 0, 0], sizes = [1, 8, 8], strides = [1, 1, 1]} : vector<1x8x32xf32> to vector<1x8x8xf32>
    "tpu.trace_start"() <{level = 10 : i32, message = "bqd,bkd->bqk"}> : () -> ()
    %cst_10 = arith.constant dense<0.000000e+00> : vector<1x8x8xf32>
    %27 = tpu.matmul %24, %25, %cst_10 {dimension_numbers = #tpu.dot_dimension_numbers<[2], [2], [1], [1], [0, 0, 0, 1, 1, 1], [0], [0]>} : vector<1x8x8xf32>, vector<1x8x8xf32>, vector<1x8x8xf32> -> vector<1x8x8xf32>
    "tpu.trace_stop"() : () -> ()
    %28 = vector.shape_cast %23 : vector<8x8xf32> to vector<1x8x8xf32>
    %29 = arith.addf %27, %28 : vector<1x8x8xf32>
    %cst_11 = arith.constant dense<0xFF800000> : vector<1x8xf32>
    %30 = vector.multi_reduction <maximumf>, %29, %cst_11 [2] : vector<1x8x8xf32> to vector<1x8xf32>
    %31 = vector.shape_cast %30 : vector<1x8xf32> to vector<1x8x1xf32>
    %32 = vector.broadcast %31 : vector<1x8x1xf32> to vector<1x8x8xf32>
    %33 = arith.subf %29, %32 : vector<1x8x8xf32>
    %34 = math.exp %33 : vector<1x8x8xf32>
    %cst_12 = arith.constant dense<0.000000e+00> : vector<1x8xf32>
    %35 = vector.multi_reduction <add>, %34, %cst_12 [2] : vector<1x8x8xf32> to vector<1x8xf32>
    %36 = vector.shape_cast %35 : vector<1x8xf32> to vector<1x8x1xf32>
    "tpu.trace_start"() <{level = 10 : i32, message = "bqk,bkd->bqd"}> : () -> ()
    %cst_13 = arith.constant dense<0.000000e+00> : vector<1x8x8xf32>
    %37 = tpu.matmul %34, %26, %cst_13 {dimension_numbers = #tpu.dot_dimension_numbers<[2], [1], [1], [2], [0, 0, 0, 1, 1, 2], [0], [0]>} : vector<1x8x8xf32>, vector<1x8x8xf32>, vector<1x8x8xf32> -> vector<1x8x8xf32>
    "tpu.trace_stop"() : () -> ()
    %38 = tpu.reciprocal %36 {approx = true} : vector<1x8x1xf32> -> vector<1x8x1xf32>
    %39 = vector.broadcast %38 : vector<1x8x1xf32> to vector<1x8x8xf32>
    %40 = arith.mulf %37, %39 : vector<1x8x8xf32>
    %41 = vector.shape_cast %40 : vector<1x8x8xf32> to vector<8x8xf32>
    %c0_14 = arith.constant 0 : index
    %c0_15 = arith.constant 0 : index
    %42 = vector.load %arg9[%c0_14, %c0_15] : memref<8x32xf32, #tpu.memory_space<vmem>>, vector<8x8xf32>
    tpu.vector_store %arg9[%c0_14, %c0_15], %41 {strides = array<i32>} : memref<8x32xf32, #tpu.memory_space<vmem>>, vector<8x8xf32>,
    %43 = vector.extract_strided_slice %15 {offsets = [0, 0, 8], sizes = [1, 8, 8], strides = [1, 1, 1]} : vector<1x8x32xf32> to vector<1x8x8xf32>
    %44 = vector.extract_strided_slice %16 {offsets = [0, 0, 8], sizes = [1, 8, 8], strides = [1, 1, 1]} : vector<1x8x32xf32> to vector<1x8x8xf32>
    %45 = vector.extract_strided_slice %17 {offsets = [0, 0, 8], sizes = [1, 8, 8], strides = [1, 1, 1]} : vector<1x8x32xf32> to vector<1x8x8xf32>
    "tpu.trace_start"() <{level = 10 : i32, message = "bqd,bkd->bqk"}> : () -> ()
    %cst_16 = arith.constant dense<0.000000e+00> : vector<1x8x8xf32>
    %46 = tpu.matmul %43, %44, %cst_16 {dimension_numbers = #tpu.dot_dimension_numbers<[2], [2], [1], [1], [0, 0, 0, 1, 1, 1], [0], [0]>} : vector<1x8x8xf32>, vector<1x8x8xf32>, vector<1x8x8xf32> -> vector<1x8x8xf32>
    "tpu.trace_stop"() : () -> ()
    %47 = vector.shape_cast %23 : vector<8x8xf32> to vector<1x8x8xf32>
    %48 = arith.addf %46, %47 : vector<1x8x8xf32>
    %cst_17 = arith.constant dense<0xFF800000> : vector<1x8xf32>
    %49 = vector.multi_reduction <maximumf>, %48, %cst_17 [2] : vector<1x8x8xf32> to vector<1x8xf32>
    %50 = vector.shape_cast %49 : vector<1x8xf32> to vector<1x8x1xf32>
    %51 = vector.broadcast %50 : vector<1x8x1xf32> to vector<1x8x8xf32>
    %52 = arith.subf %48, %51 : vector<1x8x8xf32>
    %53 = math.exp %52 : vector<1x8x8xf32>
    %cst_18 = arith.constant dense<0.000000e+00> : vector<1x8xf32>
    %54 = vector.multi_reduction <add>, %53, %cst_18 [2] : vector<1x8x8xf32> to vector<1x8xf32>
    %55 = vector.shape_cast %54 : vector<1x8xf32> to vector<1x8x1xf32>
    "tpu.trace_start"() <{level = 10 : i32, message = "bqk,bkd->bqd"}> : () -> ()
    %cst_19 = arith.constant dense<0.000000e+00> : vector<1x8x8xf32>
    %56 = tpu.matmul %53, %45, %cst_19 {dimension_numbers = #tpu.dot_dimension_numbers<[2], [1], [1], [2], [0, 0, 0, 1, 1, 2], [0], [0]>} : vector<1x8x8xf32>, vector<1x8x8xf32>, vector<1x8x8xf32> -> vector<1x8x8xf32>
    "tpu.trace_stop"() : () -> ()
    %57 = tpu.reciprocal %55 {approx = true} : vector<1x8x1xf32> -> vector<1x8x1xf32>
    %58 = vector.broadcast %57 : vector<1x8x1xf32> to vector<1x8x8xf32>
    %59 = arith.mulf %56, %58 : vector<1x8x8xf32>
    %60 = vector.shape_cast %59 : vector<1x8x8xf32> to vector<8x8xf32>
    %c0_20 = arith.constant 0 : index
    %c8 = arith.constant 8 : index
    %61 = vector.load %arg9[%c0_20, %c8] : memref<8x32xf32, #tpu.memory_space<vmem>>, vector<8x8xf32>
    tpu.vector_store %arg9[%c0_20, %c8], %60 {strides = array<i32>} : memref<8x32xf32, #tpu.memory_space<vmem>>, vector<8x8xf32>,
    %62 = vector.extract_strided_slice %15 {offsets = [0, 0, 16], sizes = [1, 8, 8], strides = [1, 1, 1]} : vector<1x8x32xf32> to vector<1x8x8xf32>
    %63 = vector.extract_strided_slice %16 {offsets = [0, 0, 16], sizes = [1, 8, 8], strides = [1, 1, 1]} : vector<1x8x32xf32> to vector<1x8x8xf32>
    %64 = vector.extract_strided_slice %17 {offsets = [0, 0, 16], sizes = [1, 8, 8], strides = [1, 1, 1]} : vector<1x8x32xf32> to vector<1x8x8xf32>
    "tpu.trace_start"() <{level = 10 : i32, message = "bqd,bkd->bqk"}> : () -> ()
    %cst_21 = arith.constant dense<0.000000e+00> : vector<1x8x8xf32>
    %65 = tpu.matmul %62, %63, %cst_21 {dimension_numbers = #tpu.dot_dimension_numbers<[2], [2], [1], [1], [0, 0, 0, 1, 1, 1], [0], [0]>} : vector<1x8x8xf32>, vector<1x8x8xf32>, vector<1x8x8xf32> -> vector<1x8x8xf32>
    "tpu.trace_stop"() : () -> ()
    %66 = vector.shape_cast %23 : vector<8x8xf32> to vector<1x8x8xf32>
    %67 = arith.addf %65, %66 : vector<1x8x8xf32>
    %cst_22 = arith.constant dense<0xFF800000> : vector<1x8xf32>
    %68 = vector.multi_reduction <maximumf>, %67, %cst_22 [2] : vector<1x8x8xf32> to vector<1x8xf32>
    %69 = vector.shape_cast %68 : vector<1x8xf32> to vector<1x8x1xf32>
    %70 = vector.broadcast %69 : vector<1x8x1xf32> to vector<1x8x8xf32>
    %71 = arith.subf %67, %70 : vector<1x8x8xf32>
    %72 = math.exp %71 : vector<1x8x8xf32>
    %cst_23 = arith.constant dense<0.000000e+00> : vector<1x8xf32>
    %73 = vector.multi_reduction <add>, %72, %cst_23 [2] : vector<1x8x8xf32> to vector<1x8xf32>
    %74 = vector.shape_cast %73 : vector<1x8xf32> to vector<1x8x1xf32>
    "tpu.trace_start"() <{level = 10 : i32, message = "bqk,bkd->bqd"}> : () -> ()
    %cst_24 = arith.constant dense<0.000000e+00> : vector<1x8x8xf32>
    %75 = tpu.matmul %72, %64, %cst_24 {dimension_numbers = #tpu.dot_dimension_numbers<[2], [1], [1], [2], [0, 0, 0, 1, 1, 2], [0], [0]>} : vector<1x8x8xf32>, vector<1x8x8xf32>, vector<1x8x8xf32> -> vector<1x8x8xf32>
    "tpu.trace_stop"() : () -> ()
    %76 = tpu.reciprocal %74 {approx = true} : vector<1x8x1xf32> -> vector<1x8x1xf32>
    %77 = vector.broadcast %76 : vector<1x8x1xf32> to vector<1x8x8xf32>
    %78 = arith.mulf %75, %77 : vector<1x8x8xf32>
    %79 = vector.shape_cast %78 : vector<1x8x8xf32> to vector<8x8xf32>
    %c0_25 = arith.constant 0 : index
    %c16 = arith.constant 16 : index
    %80 = vector.load %arg9[%c0_25, %c16] : memref<8x32xf32, #tpu.memory_space<vmem>>, vector<8x8xf32>
    tpu.vector_store %arg9[%c0_25, %c16], %79 {strides = array<i32>} : memref<8x32xf32, #tpu.memory_space<vmem>>, vector<8x8xf32>,
    %81 = vector.extract_strided_slice %15 {offsets = [0, 0, 24], sizes = [1, 8, 8], strides = [1, 1, 1]} : vector<1x8x32xf32> to vector<1x8x8xf32>
    %82 = vector.extract_strided_slice %16 {offsets = [0, 0, 24], sizes = [1, 8, 8], strides = [1, 1, 1]} : vector<1x8x32xf32> to vector<1x8x8xf32>
    %83 = vector.extract_strided_slice %17 {offsets = [0, 0, 24], sizes = [1, 8, 8], strides = [1, 1, 1]} : vector<1x8x32xf32> to vector<1x8x8xf32>
    "tpu.trace_start"() <{level = 10 : i32, message = "bqd,bkd->bqk"}> : () -> ()
    %cst_26 = arith.constant dense<0.000000e+00> : vector<1x8x8xf32>
    %84 = tpu.matmul %81, %82, %cst_26 {dimension_numbers = #tpu.dot_dimension_numbers<[2], [2], [1], [1], [0, 0, 0, 1, 1, 1], [0], [0]>} : vector<1x8x8xf32>, vector<1x8x8xf32>, vector<1x8x8xf32> -> vector<1x8x8xf32>
    "tpu.trace_stop"() : () -> ()
    %85 = vector.shape_cast %23 : vector<8x8xf32> to vector<1x8x8xf32>
    %86 = arith.addf %84, %85 : vector<1x8x8xf32>
    %cst_27 = arith.constant dense<0xFF800000> : vector<1x8xf32>
    %87 = vector.multi_reduction <maximumf>, %86, %cst_27 [2] : vector<1x8x8xf32> to vector<1x8xf32>
    %88 = vector.shape_cast %87 : vector<1x8xf32> to vector<1x8x1xf32>
    %89 = vector.broadcast %88 : vector<1x8x1xf32> to vector<1x8x8xf32>
    %90 = arith.subf %86, %89 : vector<1x8x8xf32>
    %91 = math.exp %90 : vector<1x8x8xf32>
    %cst_28 = arith.constant dense<0.000000e+00> : vector<1x8xf32>
    %92 = vector.multi_reduction <add>, %91, %cst_28 [2] : vector<1x8x8xf32> to vector<1x8xf32>
    %93 = vector.shape_cast %92 : vector<1x8xf32> to vector<1x8x1xf32>
    "tpu.trace_start"() <{level = 10 : i32, message = "bqk,bkd->bqd"}> : () -> ()
    %cst_29 = arith.constant dense<0.000000e+00> : vector<1x8x8xf32>
    %94 = tpu.matmul %91, %83, %cst_29 {dimension_numbers = #tpu.dot_dimension_numbers<[2], [1], [1], [2], [0, 0, 0, 1, 1, 2], [0], [0]>} : vector<1x8x8xf32>, vector<1x8x8xf32>, vector<1x8x8xf32> -> vector<1x8x8xf32>
    "tpu.trace_stop"() : () -> ()
    %95 = tpu.reciprocal %93 {approx = true} : vector<1x8x1xf32> -> vector<1x8x1xf32>
    %96 = vector.broadcast %95 : vector<1x8x1xf32> to vector<1x8x8xf32>
    %97 = arith.mulf %94, %96 : vector<1x8x8xf32>
    %98 = vector.shape_cast %97 : vector<1x8x8xf32> to vector<8x8xf32>
    %c0_30 = arith.constant 0 : index
    %c24 = arith.constant 24 : index
    %99 = vector.load %arg9[%c0_30, %c24] : memref<8x32xf32, #tpu.memory_space<vmem>>, vector<8x8xf32>
    tpu.vector_store %arg9[%c0_30, %c24], %98 {strides = array<i32>} : memref<8x32xf32, #tpu.memory_space<vmem>>, vector<8x8xf32>,
    %c0_31 = arith.constant 0 : index
    %c0_32 = arith.constant 0 : index
    %100 = vector.load %arg9[%c0_31, %c0_32] : memref<8x32xf32, #tpu.memory_space<vmem>>, vector<8x32xf32>
    %cst_33 = arith.constant dense<0.000000e+00> : vector<8x32xf32>
    %101 = tpu.matmul %100, %5, %cst_33 {dimension_numbers = #tpu.dot_dimension_numbers<[1], [0], [0], [1], [0, 0, 1, 1], [], []>} : vector<8x32xf32>, vector<32x32xf32>, vector<8x32xf32> -> vector<8x32xf32>
    %c0_i32 = arith.constant 0 : i32
    %102 = arith.cmpi eq, %arg1, %c0_i32 : i32
    %103 = arith.extui %102 : i1 to i32
    %c0_i32_34 = arith.constant 0 : i32
    %104 = arith.cmpi ne, %103, %c0_i32_34 : i32
    scf.if %104 {
      %c0_39 = arith.constant 0 : index
      %c0_40 = arith.constant 0 : index
      %111 = vector.load %arg6[%c0_39, %c0_40] : memref<1x32xf32, #tpu.memory_space<vmem>>, vector<1x32xf32>
      %112 = vector.broadcast %111 : vector<1x32xf32> to vector<8x32xf32>
      %113 = arith.addf %101, %112 : vector<8x32xf32>
      %c0_41 = arith.constant 0 : index
      %c0_42 = arith.constant 0 : index
      %114 = vector.load %arg8[%c0_41, %c0_42] : memref<8x32xf32, #tpu.memory_space<vmem>>, vector<8x32xf32>
      tpu.vector_store %arg8[%c0_41, %c0_42], %113 {strides = array<i32>} : memref<8x32xf32, #tpu.memory_space<vmem>>, vector<8x32xf32>,
    } else {
    }
    %c0_i32_35 = arith.constant 0 : i32
    %105 = arith.cmpi ne, %arg1, %c0_i32_35 : i32
    %106 = arith.extui %105 : i1 to i32
    %c0_i32_36 = arith.constant 0 : i32
    %107 = arith.cmpi ne, %106, %c0_i32_36 : i32
    scf.if %107 {
      %c0_39 = arith.constant 0 : index
      %c0_40 = arith.constant 0 : index
      %111 = vector.load %arg8[%c0_39, %c0_40] : memref<8x32xf32, #tpu.memory_space<vmem>>, vector<8x32xf32>
      %112 = arith.addf %111, %101 : vector<8x32xf32>
      %c0_41 = arith.constant 0 : index
      %c0_42 = arith.constant 0 : index
      %113 = vector.load %arg8[%c0_41, %c0_42] : memref<8x32xf32, #tpu.memory_space<vmem>>, vector<8x32xf32>
      tpu.vector_store %arg8[%c0_41, %c0_42], %112 {strides = array<i32>} : memref<8x32xf32, #tpu.memory_space<vmem>>, vector<8x32xf32>,
    } else {
    }
    %c0_i32_37 = arith.constant 0 : i32
    %108 = arith.cmpi eq, %arg1, %c0_i32_37 : i32
    %109 = arith.extui %108 : i1 to i32
    %c0_i32_38 = arith.constant 0 : i32
    %110 = arith.cmpi ne, %109, %c0_i32_38 : i32
    scf.if %110 {
      %c0_39 = arith.constant 0 : index
      %c0_40 = arith.constant 0 : index
      %111 = vector.load %arg8[%c0_39, %c0_40] : memref<8x32xf32, #tpu.memory_space<vmem>>, vector<8x32xf32>
      %112 = vector.shape_cast %111 : vector<8x32xf32> to vector<1x8x32xf32>
      %c0_41 = arith.constant 0 : index
      %c0_42 = arith.constant 0 : index
      %c0_43 = arith.constant 0 : index
      %113 = vector.load %arg7[%c0_41, %c0_42, %c0_43] : memref<1x8x32xf32, #tpu.memory_space<vmem>>, vector<1x8x32xf32>
      tpu.vector_store %arg7[%c0_41, %c0_42, %c0_43], %112 {strides = array<i32>} : memref<1x8x32xf32, #tpu.memory_space<vmem>>, vector<1x8x32xf32>,
    } else {
    }
    return
  }
  func.func @transform_0(%arg0: i32, %arg1: i32) -> (i32, i32, i32) {
    %c0_i32 = arith.constant 0 : i32
    %c0_i32_0 = arith.constant 0 : i32
    %c0_i32_1 = arith.constant 0 : i32
    return %arg0, %c0_i32, %c0_i32_0 : i32, i32, i32
  }
  func.func @transform_1(%arg0: i32, %arg1: i32) -> (i32, i32, i32) {
    %c0_i32 = arith.constant 0 : i32
    %c0_i32_0 = arith.constant 0 : i32
    %c0_i32_1 = arith.constant 0 : i32
    %c0_i32_2 = arith.constant 0 : i32
    return %c0_i32, %c0_i32_0, %c0_i32_1 : i32, i32, i32
  }
  func.func @transform_2(%arg0: i32, %arg1: i32) -> (i32, i32, i32) {
    %c0_i32 = arith.constant 0 : i32
    %c0_i32_0 = arith.constant 0 : i32
    %c0_i32_1 = arith.constant 0 : i32
    %c0_i32_2 = arith.constant 0 : i32
    return %c0_i32, %c0_i32_0, %c0_i32_1 : i32, i32, i32
  }
  func.func @transform_3(%arg0: i32, %arg1: i32) -> (i32, i32, i32) {
    %c0_i32 = arith.constant 0 : i32
    %c0_i32_0 = arith.constant 0 : i32
    %c0_i32_1 = arith.constant 0 : i32
    %c0_i32_2 = arith.constant 0 : i32
    return %c0_i32, %c0_i32_0, %c0_i32_1 : i32, i32, i32
  }
  func.func @transform_4(%arg0: i32, %arg1: i32) -> (i32, i32) {
    %c0_i32 = arith.constant 0 : i32
    %c0_i32_0 = arith.constant 0 : i32
    %c0_i32_1 = arith.constant 0 : i32
    return %c0_i32, %c0_i32_0 : i32, i32
  }
  func.func @transform_5(%arg0: i32, %arg1: i32) -> (i32, i32, i32) {
    %c0_i32 = arith.constant 0 : i32
    %c0_i32_0 = arith.constant 0 : i32
    %c0_i32_1 = arith.constant 0 : i32
    return %arg0, %c0_i32, %c0_i32_0 : i32, i32, i32
  }
}

</mosaic_0001>

<llo_original>
// kernel: tpu_custom_call.1
$region0: #{tpu_custom_call.1}
  #allocation0 [shape = 'u32[]', space=smem, size = 0x4, offset = 0x4, fixed_abs, tag = 'smem constant byte address 0x4 - core index']
  #allocation1 [shape = 'u32[144,128]{1,0:T(1,128)}', space=vmem, size = 0x12000, scoped, tag = 'internal scratch']
  #allocation2 [shape = 'f32[8,32]{1,0:T(8,128)}', space=vmem, size = 0x1000, scoped, tag = 'scratch operand']
  #allocation3 [shape = 'f32[8,32]{1,0:T(8,128)}', space=vmem, size = 0x1000, scoped, tag = 'scratch operand']
  %s0 = inlined_call_operand.hbm [shape: f32[2,8,32], index: 0, kind: input, shape index: {}]
  %s1 = inlined_call_operand.hbm [shape: f32[1,32,96], index: 1, kind: input, shape index: {}]
  %s2 = inlined_call_operand.vmem [shape: f32[1,1,96], index: 2, kind: input, shape index: {}]
  %s3 = inlined_call_operand.hbm [shape: f32[1,32,32], index: 3, kind: input, shape index: {}]
  %s4 = inlined_call_operand.vmem [shape: f32[1,32], index: 4, kind: input, shape index: {}]
  %s5 = inlined_call_operand.hbm [shape: f32[2,8,32], index: 5, kind: output, shape index: {}]
  %s6 = sld [smem:[#allocation0]]
  $region77: #{tpu_custom_call.1} parent=0
    _
  %s8 = ssub.s32 1, %s6
  %s9 = scalar_select 0, %s8, %s6
  $region1: #{tpu_custom_call.1} parent=0
    #allocation4 [shape = 'u8[8192]{0}', space=vmem, size = 0x2000, scoped, tag = 'input window, operand 0']
    #allocation5 [shape = 's32[2]{0}', space=sflag, size = 0x8, scoped, tag = 'scoped memory for tpu_custom_call.1']
    #allocation6 [shape = 's32[2]{0}', space=sflag, size = 0x8, scoped, tag = 'scoped memory for tpu_custom_call.1']
    #allocation7 [shape = 'u8[16384]{0}', space=vmem, size = 0x4000, scoped, tag = 'input window, operand 1, single buffered']
    #allocation8 [shape = 's32[1]{0}', space=sflag, size = 0x4, scoped, tag = 'scoped memory for tpu_custom_call.1']
    #allocation9 [shape = 'u8[16384]{0}', space=vmem, size = 0x4000, scoped, tag = 'input window, operand 3, single buffered']
    #allocation10 [shape = 'u8[8192]{0}', space=vmem, size = 0x2000, scoped, tag = 'output window, operand 0']
    %10 = vsyncpa [#allocation5], 0
    %s11 = scalar_lea.sflag [#allocation5], 1
    %12 = vsyncpa %s11, 0
    %13 = vsyncpa [#allocation8], 0
    %14 = vsyncpa [#allocation6], 0
    %s15 = scalar_lea.sflag [#allocation6], 1
    %16 = vsyncpa %s15, 0
    loop: start=0, step=1, limit=4
    $region2: #{tpu_custom_call.1} parent=1 // loop_pre_header
      _
    $region3: #{tpu_custom_call.1} parent=1 // loop_header
      %s18 = sphi 0, %s22
      %p19 = scmp.ge.s32.totalorder %s18, 4
      %s25 = sphi 0, %s37
      %s26 = sphi 0, %s33
      %s27 = sphi 0, %s25
      %s28 = sphi 0, %s26
      %s29 = sphi 0, %s27
      %s30 = sphi 0, %s28
      %s40 = sphi 0, %s42
      %s43 = sphi 0, %s40
      %s44 = sphi 0, %s43
      %s60 = sphi 0, %s44
      %s64 = sphi 0, %s64
      %s66 = sphi 0, %s64
      %s67 = sphi 0, %s66
      %s81 = sphi 0, %s67
      %s85 = sphi 0, %s85
      %s87 = sphi 0, %s85
      %s88 = sphi 0, %s87
      %s102 = sphi 0, %s88
      %s106 = sphi 0, %s106
      %s108 = sphi 0, %s106
      %s109 = sphi 0, %s108
      %s123 = sphi 0, %s109
      %s127 = sphi 0, %s127
      %s129 = sphi 0, %s127
      %s130 = sphi 0, %s129
      %s144 = sphi 0, %s130
      %s150 = sphi 0, %s152
      %s153 = sphi 0, %s150
      %s154 = sphi 0, %s153
      %s170 = sphi 0, %s154
    $region4: #{tpu_custom_call.1} parent=1 // loop_header_branch
      %21 = sbr.rel (%p19) target = $region8
    $region5: #{tpu_custom_call.1} parent=1 // loop_body
      %s23 = ssub.s32 %s18, 1
      %s24 = ssub.s32 %s18, 2
      %s31 = sadd.s32 1, %s26
      %p32 = scmp.ge.s32.totalorder %s31, 1
      %s33 = scalar_select %p32, 0, %s31
      %s34 = sadd.s32 1, %s25
      %s35 = scalar_select %p32, %s34, %s25
      %p36 = scmp.ge.s32.totalorder %s35, 2
      %s37 = scalar_select %p36, 0, %s35
      %s38 = ssub.s32 %s25, %s37
      %p39 = scmp.eq.s32.totalorder %s38, 0
      %s41 = sadd.s32 %s40, 1
      %s42 = scalar_select %p39, %s40, %s41
      %p45 = pneg %p39
      %p46 = scmp.eq.s32.totalorder %s18, 1
      %p47 = por %p45, %p46
      %p48 = scmp.ne.s32.totalorder %s40, %s43
      %p49 = scmp.eq.s32.totalorder %s18, 0
      %p50 = por %p48, %p49
      %p51 = scmp.ne.s32.totalorder %s40, %s43
      %p52 = scmp.eq.s32.totalorder %s23, 1
      %p53 = por %p51, %p52
      %p54 = scmp.ne.s32.totalorder %s43, %s44
      %p55 = scmp.eq.s32.totalorder %s23, 0
      %p56 = por %p54, %p55
      %p57 = scmp.ne.s32.totalorder %s43, %s44
      %p58 = scmp.eq.s32.totalorder %s24, 1
      %p59 = por %p57, %p58
      %p61 = scmp.ne.s32.totalorder %s44, %s60
      %p62 = scmp.eq.s32.totalorder %s24, 0
      %p63 = por %p61, %p62
      %s65 = sadd.s32 %s64, 1
      %p68 = scmp.eq.s32.totalorder %s18, 1
      %p69 = scmp.ne.s32.totalorder %s64, %s66
      %p70 = scmp.eq.s32.totalorder %s18, 0
      %p71 = por %p69, %p70
      %p72 = scmp.ne.s32.totalorder %s64, %s66
      %p73 = scmp.eq.s32.totalorder %s23, 1
      %p74 = por %p72, %p73
      %p75 = scmp.ne.s32.totalorder %s66, %s67
      %p76 = scmp.eq.s32.totalorder %s23, 0
      %p77 = por %p75, %p76
      %p78 = scmp.ne.s32.totalorder %s66, %s67
      %p79 = scmp.eq.s32.totalorder %s24, 1
      %p80 = por %p78, %p79
      %p82 = scmp.ne.s32.totalorder %s67, %s81
      %p83 = scmp.eq.s32.totalorder %s24, 0
      %p84 = por %p82, %p83
      %s86 = sadd.s32 %s85, 1
      %p89 = scmp.eq.s32.totalorder %s18, 1
      %p90 = scmp.ne.s32.totalorder %s85, %s87
      %p91 = scmp.eq.s32.totalorder %s18, 0
      %p92 = por %p90, %p91
      %p93 = scmp.ne.s32.totalorder %s85, %s87
      %p94 = scmp.eq.s32.totalorder %s23, 1
      %p95 = por %p93, %p94
      %p96 = scmp.ne.s32.totalorder %s87, %s88
      %p97 = scmp.eq.s32.totalorder %s23, 0
      %p98 = por %p96, %p97
      %p99 = scmp.ne.s32.totalorder %s87, %s88
      %p100 = scmp.eq.s32.totalorder %s24, 1
      %p101 = por %p99, %p100
      %p103 = scmp.ne.s32.totalorder %s88, %s102
      %p104 = scmp.eq.s32.totalorder %s24, 0
      %p105 = por %p103, %p104
      %s107 = sadd.s32 %s106, 1
      %p110 = scmp.eq.s32.totalorder %s18, 1
      %p111 = scmp.ne.s32.totalorder %s106, %s108
      %p112 = scmp.eq.s32.totalorder %s18, 0
      %p113 = por %p111, %p112
      %p114 = scmp.ne.s32.totalorder %s106, %s108
      %p115 = scmp.eq.s32.totalorder %s23, 1
      %p116 = por %p114, %p115
      %p117 = scmp.ne.s32.totalorder %s108, %s109
      %p118 = scmp.eq.s32.totalorder %s23, 0
      %p119 = por %p117, %p118
      %p120 = scmp.ne.s32.totalorder %s108, %s109
      %p121 = scmp.eq.s32.totalorder %s24, 1
      %p122 = por %p120, %p121
      %p124 = scmp.ne.s32.totalorder %s109, %s123
      %p125 = scmp.eq.s32.totalorder %s24, 0
      %p126 = por %p124, %p125
      %s128 = sadd.s32 %s127, 1
      %p131 = scmp.eq.s32.totalorder %s18, 1
      %p132 = scmp.ne.s32.totalorder %s127, %s129
      %p133 = scmp.eq.s32.totalorder %s18, 0
      %p134 = por %p132, %p133
      %p135 = scmp.ne.s32.totalorder %s127, %s129
      %p136 = scmp.eq.s32.totalorder %s23, 1
      %p137 = por %p135, %p136
      %p138 = scmp.ne.s32.totalorder %s129, %s130
      %p139 = scmp.eq.s32.totalorder %s23, 0
      %p140 = por %p138, %p139
      %p141 = scmp.ne.s32.totalorder %s129, %s130
      %p142 = scmp.eq.s32.totalorder %s24, 1
      %p143 = por %p141, %p142
      %p145 = scmp.ne.s32.totalorder %s130, %s144
      %p146 = scmp.eq.s32.totalorder %s24, 0
      %p147 = por %p145, %p146
      %s148 = ssub.s32 %s25, %s37
      %p149 = scmp.eq.s32.totalorder %s148, 0
      %s151 = sadd.s32 %s150, 1
      %s152 = scalar_select %p149, %s150, %s151
      %p155 = pneg %p149
      %p156 = scmp.eq.s32.totalorder %s18, 1
      %p157 = por %p155, %p156
      %p158 = scmp.ne.s32.totalorder %s150, %s153
      %p159 = scmp.eq.s32.totalorder %s18, 0
      %p160 = por %p158, %p159
      %p161 = scmp.ne.s32.totalorder %s150, %s153
      %p162 = scmp.eq.s32.totalorder %s23, 1
      %p163 = por %p161, %p162
      %p164 = scmp.ne.s32.totalorder %s153, %s154
      %p165 = scmp.eq.s32.totalorder %s23, 0
      %p166 = por %p164, %p165
      %p167 = scmp.ne.s32.totalorder %s153, %s154
      %p168 = scmp.eq.s32.totalorder %s24, 1
      %p169 = por %p167, %p168
      %p171 = scmp.ne.s32.totalorder %s154, %s170
      %p172 = scmp.eq.s32.totalorder %s24, 0
      %p173 = por %p171, %p172
      %p174 = scmp.le.s32.totalorder 1, %s18
      %p175 = scmp.lt.s32.totalorder %s18, 3
      %p176 = pnand %p174, %p175
      %p177 = pneg %p176
      // Predicated region
      $region9: #{tpu_custom_call.1} parent=5 // pred_check
        _
      $region10: #{tpu_custom_call.1} parent=5 // pred_check_branch
        %179 = sbr.rel (%p176) target = $region12
      $region11: #{tpu_custom_call.1} parent=5 // pred_region
        %s180 = ssub.s32 %s18, 1
        // Predicated region
        $region13: #{tpu_custom_call.1} parent=11 // pred_check
          %p181 = pneg %p77
        $region14: #{tpu_custom_call.1} parent=11 // pred_check_branch
          %183 = sbr.rel (%p181) target = $region16
        $region15: #{tpu_custom_call.1} parent=11 // pred_region
          %s185 = ssub.s32 512, 512
          %186 = vsyncadd [#allocation8], %s185
          %s187 = sshll.u32 [#allocation7], 4
          %s188 = int_to_ptr.vmem [resolvable:$true] %s187
          %193 = dma.hbm_to_vmem [thread:$0]  %s1, 512, %s188, [#allocation8], 128, 128, 8
        $region16: #{tpu_custom_call.1} parent=11 // pred_fallthru
          _
        // Predicated region
        $region17: #{tpu_custom_call.1} parent=11 // pred_check
          %p194 = pneg %p98
        $region18: #{tpu_custom_call.1} parent=11 // pred_check_branch
          %196 = sbr.rel (%p194) target = $region20
        $region19: #{tpu_custom_call.1} parent=11 // pred_region
          _
        $region20: #{tpu_custom_call.1} parent=11 // pred_fallthru
          _
        // Predicated region
        $region21: #{tpu_custom_call.1} parent=11 // pred_check
          %p197 = pneg %p119
        $region22: #{tpu_custom_call.1} parent=11 // pred_check_branch
          %199 = sbr.rel (%p197) target = $region24
        $region23: #{tpu_custom_call.1} parent=11 // pred_region
          %s201 = ssub.s32 512, 512
          %202 = vsyncadd [#allocation8], %s201
          %s203 = sshll.u32 [#allocation9], 4
          %s204 = int_to_ptr.vmem [resolvable:$true] %s203
          %209 = dma.hbm_to_vmem [thread:$0]  %s3, 512, %s204, [#allocation8], 128, 128, 8
        $region24: #{tpu_custom_call.1} parent=11 // pred_fallthru
          _
        // Predicated region
        $region25: #{tpu_custom_call.1} parent=11 // pred_check
          %p210 = pneg %p140
        $region26: #{tpu_custom_call.1} parent=11 // pred_check_branch
          %212 = sbr.rel (%p210) target = $region28
        $region27: #{tpu_custom_call.1} parent=11 // pred_region
          _
        $region28: #{tpu_custom_call.1} parent=11 // pred_fallthru
          _
      $region12: #{tpu_custom_call.1} parent=5 // pred_fallthru
        _
      %p213 = scmp.lt.s32.totalorder %s18, 2
      // Predicated region
      $region29: #{tpu_custom_call.1} parent=5 // pred_check
        %p214 = pneg %p213
      $region30: #{tpu_custom_call.1} parent=5 // pred_check_branch
        %216 = sbr.rel (%p214) target = $region32
      $region31: #{tpu_custom_call.1} parent=5 // pred_region
        // Predicated region
        $region33: #{tpu_custom_call.1} parent=31 // pred_check
          %p217 = pneg %p50
        $region34: #{tpu_custom_call.1} parent=31 // pred_check_branch
          %219 = sbr.rel (%p217) target = $region36
        $region35: #{tpu_custom_call.1} parent=31 // pred_region
          %s220 = sand.u32 %s40, 1
          %s221 = scalar_lea.sflag [#allocation5], %s220
          %s222 = sand.u32 %s40, 1
          %s223 = smul.addr %s222, 8
          %s224 = scalar_lea.vmem [#allocation4], %s223
          %s226 = ssub.s32 128, 128
          %227 = vsyncadd %s221, %s226
          %s228 = smul.addr %s25, 128
          %s229 = scalar_lea.hbm %s0, %s228
          %s231 = sshll.u32 %s224, 4
          %s232 = int_to_ptr.vmem [resolvable:$true] %s231
          %234 = dma.hbm_to_vmem [thread:$0]  %s229, 128, %s232, %s221
        $region36: #{tpu_custom_call.1} parent=31 // pred_fallthru
          _
      $region32: #{tpu_custom_call.1} parent=5 // pred_fallthru
        _
      %p235 = scmp.le.s32.totalorder 1, %s18
      %p236 = scmp.lt.s32.totalorder %s18, 3
      %p237 = pnand %p235, %p236
      %p238 = pneg %p237
      // Predicated region
      $region37: #{tpu_custom_call.1} parent=5 // pred_check
        _
      $region38: #{tpu_custom_call.1} parent=5 // pred_check_branch
        %240 = sbr.rel (%p237) target = $region40
      $region39: #{tpu_custom_call.1} parent=5 // pred_region
        %s241 = ssub.s32 %s18, 1
        %s242 = sand.u32 %s43, 1
        %s243 = scalar_lea.sflag [#allocation5], %s242
        %s244 = sand.u32 %s43, 1
        %s245 = smul.addr %s244, 8
        %s246 = scalar_lea.vmem [#allocation4], %s245
        // Predicated region
        $region41: #{tpu_custom_call.1} parent=39 // pred_check
          %p247 = pneg %p56
        $region42: #{tpu_custom_call.1} parent=39 // pred_check_branch
          %249 = sbr.rel (%p247) target = $region44
        $region43: #{tpu_custom_call.1} parent=39 // pred_region
          %250 = dma.done %s243, 128
        $region44: #{tpu_custom_call.1} parent=39 // pred_fallthru
          _
        // Predicated region
        $region45: #{tpu_custom_call.1} parent=39 // pred_check
          %p251 = pneg %p77
        $region46: #{tpu_custom_call.1} parent=39 // pred_check_branch
          %253 = sbr.rel (%p251) target = $region48
        $region47: #{tpu_custom_call.1} parent=39 // pred_region
          %254 = dma.done [#allocation8], 512
        $region48: #{tpu_custom_call.1} parent=39 // pred_fallthru
          _
        // Predicated region
        $region49: #{tpu_custom_call.1} parent=39 // pred_check
          %p255 = pneg %p119
        $region50: #{tpu_custom_call.1} parent=39 // pred_check_branch
          %257 = sbr.rel (%p255) target = $region52
        $region51: #{tpu_custom_call.1} parent=39 // pred_region
          %258 = dma.done [#allocation8], 512
        $region52: #{tpu_custom_call.1} parent=39 // pred_fallthru
          _
        %s259 = sand.u32 %s43, 1
        %s260 = scalar_lea.sflag [#allocation5], %s259
        %s261 = sand.u32 %s43, 1
        %s262 = smul.addr %s261, 8
        %s263 = scalar_lea.vmem [#allocation4], %s262
        %p264 = pneg %p56
        %p265 = pneg %p53
        %p266 = pneg %p77
        %p267 = pneg %p74
        %p268 = pneg %p98
        %p269 = pneg %p95
        %p270 = pneg %p119
        %p271 = pneg %p116
        %p272 = pneg %p140
        %p273 = pneg %p137
        %p274 = pneg %p166
        %p275 = pneg %p163
        %s276 = sand.u32 %s153, 1
        %s277 = scalar_lea.sflag [#allocation6], %s276
        %s278 = sand.u32 %s153, 1
        %s279 = smul.addr %s278, 8
        %s280 = scalar_lea.vmem [#allocation10], %s279
        %s281 = smul.u32 %s28, 32
        %s282 = scalar_lea.vmem [#allocation7], %s281
        %v283 = vld [vmem:[%s282] sm:$0xff]
        %v284 = vld [vmem:[%s282 + $0x8] sm:$0xff]
        %v285 = vld [vmem:[%s282 + $0x10] sm:$0xff]
        %v286 = vld [vmem:[%s282 + $0x18] sm:$0xff]
        %s287 = scalar_lea.vmem [#allocation9], %s281
        %v288 = vld [vmem:[%s287] sm:$0xff]
        %v289 = vld [vmem:[%s287 + $0x8] sm:$0xff]
        %v290 = vld [vmem:[%s287 + $0x10] sm:$0xff]
        %v291 = vld [vmem:[%s287 + $0x18] sm:$0xff]
        %s292 = scalar_lea.vmem %s2, %s28
        %v293 = vld [vmem:[%s292] sm:$0x1]
        %v294 = vld [vmem:[%s246] sm:$0xff]
        %v296 = vlaneseq
        %v297 = vshrl.u32 %v296, 7
        %v298 = vsub.s32 0, %v297
        %v299 = vrot.slane %v293, %v298
        %vm301 = vcmask 261120
        %v303 = vsel %vm301, %v294, 0
        %305 = vmatprep.subr.mxu0 0.0
        %306 = vmatpush1.msra.mxu0 0.0
        %307 = vmatprep.subr.mxu0 0.0
        %308 = vmatpush1.msra.mxu0 0.0
        %309 = vmatprep.subr.mxu0 0.0
        %310 = vmatpush1.msra.mxu0 0.0
        %311 = vmatprep.subr.mxu0 0.0
        %312 = vmatpush1.msra.mxu0 0.0
        %313 = vmatprep.subr.mxu0 0.0
        %314 = vmatpush1.msra.mxu0 0.0
        %315 = vmatprep.subr.mxu0 0.0
        %316 = vmatpush1.msra.mxu0 0.0
        %317 = vmatprep.subr.mxu0 0.0
        %318 = vmatpush1.msra.mxu0 0.0
        %319 = vmatprep.subr.mxu0 0.0
        %320 = vmatpush1.msra.mxu0 0.0
        %321 = vmatprep.subr.mxu0 0.0
        %322 = vmatpush1.msra.mxu0 0.0
        %323 = vmatprep.subr.mxu0 0.0
        %324 = vmatpush1.msra.mxu0 0.0
        %325 = vmatprep.subr.mxu0 0.0
        %326 = vmatpush1.msra.mxu0 0.0
        %327 = vmatprep.subr.mxu0 0.0
        %328 = vmatpush1.msra.mxu0 0.0
        %329 = vmatprep.subr.mxu0 0.0
        %330 = vmatpush1.msra.mxu0 %v286
        %331 = vmatprep.subr.mxu0 0.0
        %332 = vmatpush1.msra.mxu0 %v285
        %333 = vmatprep.subr.mxu0 0.0
        %334 = vmatpush1.msra.mxu0 %v284
        %335 = vmatprep.subr.mxu0 0.0
        %336 = vmatpush1.msra.mxu0 %v283
        %337 = vmatprep.subr.mxu0 0.0
        %338 = vmatpush2.msra.mxu0 0.0
        %339 = vmatprep.subr.mxu0 0.0
        %340 = vmatpush2.msra.mxu0 0.0
        %341 = vmatprep.subr.mxu0 0.0
        %342 = vmatpush2.msra.mxu0 0.0
        %343 = vmatprep.subr.mxu0 0.0
        %344 = vmatpush2.msra.mxu0 0.0
        %345 = vmatprep.subr.mxu0 0.0
        %346 = vmatpush2.msra.mxu0 0.0
        %347 = vmatprep.subr.mxu0 0.0
        %348 = vmatpush2.msra.mxu0 0.0
        %349 = vmatprep.subr.mxu0 0.0
        %350 = vmatpush2.msra.mxu0 0.0
        %351 = vmatprep.subr.mxu0 0.0
        %352 = vmatpush2.msra.mxu0 0.0
        %353 = vmatprep.subr.mxu0 0.0
        %354 = vmatpush2.msra.mxu0 0.0
        %355 = vmatprep.subr.mxu0 0.0
        %356 = vmatpush2.msra.mxu0 0.0
        %357 = vmatprep.subr.mxu0 0.0
        %358 = vmatpush2.msra.mxu0 0.0
        %359 = vmatprep.subr.mxu0 0.0
        %360 = vmatpush2.msra.mxu0 0.0
        %361 = vmatprep.subr.mxu0 0.0
        %362 = vmatpush2.msra.mxu0 0.0
        %363 = vmatprep.subr.mxu0 0.0
        %364 = vmatpush2.msra.mxu0 0.0
        %365 = vmatprep.subr.mxu0 0.0
        %366 = vmatpush2.msra.mxu0 0.0
        %367 = vmatprep.subr.mxu0 0.0
        %368 = vmatpush2.msra.mxu0 0.0
        %369 = vmatprep.mubr.f32.mxu0 0.0
        %370 = vmatmul.mubr.f32.gmra.mxu0 %v303
        %v371 = vpop.f32.mrf.mxu0
        %v372 = vadd.f32 %v299, %v371
        %v373 = vpop.f32.mrf.mxu0
        %374 = vdwg.mxu0
        %v375 = vlaneseq
        %v376 = vshrl.u32 %v375, 7
        %v377 = vlaneseq
        %v378 = vand.u32 %v377, 127
        %vm379 = vcmp.le.s32.totalorder %v378, %v376
        %v380 = vsel %vm379, 0.0, -1e+09
        %382 = vrot.lane.b32.xlu0 %v372, 96
        %v383 = vpop.permute.xlu0 %382
        %vm384 = vcmask 64512
        %v385 = vsel %vm384, %v372, 0
        %v387 = vsel %vm384, %v383, 0
        %389 = vmatprep.subr.mxu0 0.0
        %390 = vmatpush1.xpose.msra.mxu0 0.0
        %391 = vmatprep.subr.mxu0 0.0
        %392 = vmatpush1.xpose.msra.mxu0 0.0
        %393 = vmatprep.subr.mxu0 0.0
        %394 = vmatpush1.xpose.msra.mxu0 0.0
        %395 = vmatprep.subr.mxu0 0.0
        %396 = vmatpush1.xpose.msra.mxu0 0.0
        %397 = vmatprep.subr.mxu0 0.0
        %398 = vmatpush1.xpose.msra.mxu0 0.0
        %399 = vmatprep.subr.mxu0 0.0
        %400 = vmatpush1.xpose.msra.mxu0 0.0
        %401 = vmatprep.subr.mxu0 0.0
        %402 = vmatpush1.xpose.msra.mxu0 0.0
        %403 = vmatprep.subr.mxu0 0.0
        %404 = vmatpush1.xpose.msra.mxu0 0.0
        %405 = vmatprep.subr.mxu0 0.0
        %406 = vmatpush1.xpose.msra.mxu0 0.0
        %407 = vmatprep.subr.mxu0 0.0
        %408 = vmatpush1.xpose.msra.mxu0 0.0
        %409 = vmatprep.subr.mxu0 0.0
        %410 = vmatpush1.xpose.msra.mxu0 0.0
        %411 = vmatprep.subr.mxu0 0.0
        %412 = vmatpush1.xpose.msra.mxu0 0.0
        %413 = vmatprep.subr.mxu0 0.0
        %414 = vmatpush1.xpose.msra.mxu0 0.0
        %415 = vmatprep.subr.mxu0 0.0
        %416 = vmatpush1.xpose.msra.mxu0 0.0
        %417 = vmatprep.subr.mxu0 0.0
        %418 = vmatpush1.xpose.msra.mxu0 0.0
        %419 = vmatprep.subr.mxu0 0.0
        %420 = vmatpush1.xpose.msra.mxu0 %v387
        %421 = vmatprep.subr.mxu0 0.0
        %422 = vmatpush2.xpose.msra.mxu0 0.0
        %423 = vmatprep.subr.mxu0 0.0
        %424 = vmatpush2.xpose.msra.mxu0 0.0
        %425 = vmatprep.subr.mxu0 0.0
        %426 = vmatpush2.xpose.msra.mxu0 0.0
        %427 = vmatprep.subr.mxu0 0.0
        %428 = vmatpush2.xpose.msra.mxu0 0.0
        %429 = vmatprep.subr.mxu0 0.0
        %430 = vmatpush2.xpose.msra.mxu0 0.0
        %431 = vmatprep.subr.mxu0 0.0
        %432 = vmatpush2.xpose.msra.mxu0 0.0
        %433 = vmatprep.subr.mxu0 0.0
        %434 = vmatpush2.xpose.msra.mxu0 0.0
        %435 = vmatprep.subr.mxu0 0.0
        %436 = vmatpush2.xpose.msra.mxu0 0.0
        %437 = vmatprep.subr.mxu0 0.0
        %438 = vmatpush2.xpose.msra.mxu0 0.0
        %439 = vmatprep.subr.mxu0 0.0
        %440 = vmatpush2.xpose.msra.mxu0 0.0
        %441 = vmatprep.subr.mxu0 0.0
        %442 = vmatpush2.xpose.msra.mxu0 0.0
        %443 = vmatprep.subr.mxu0 0.0
        %444 = vmatpush2.xpose.msra.mxu0 0.0
        %445 = vmatprep.subr.mxu0 0.0
        %446 = vmatpush2.xpose.msra.mxu0 0.0
        %447 = vmatprep.subr.mxu0 0.0
        %448 = vmatpush2.xpose.msra.mxu0 0.0
        %449 = vmatprep.subr.mxu0 0.0
        %450 = vmatpush2.xpose.msra.mxu0 0.0
        %451 = vmatprep.subr.mxu0 0.0
        %452 = vmatpush2.xpose.msra.mxu0 0.0
        %453 = vmatprep.mubr.f32.mxu0 0.0
        %454 = vmatmul.mubr.f32.gmra.mxu0 %v385
        %v455 = vpop.f32.mrf.mxu0
        %v456 = vadd.f32 %v380, %v455
        %v457 = vpop.f32.mrf.mxu0
        %458 = vdwg.mxu0
        %v459 = vsel %vm384, %v456, -inf
        %460 = vmax.xlane.f32.xlu0 %v459
        %v461 = vpop.xlane.xlu0 %460
        %v462 = vsub.f32 %v456, %v461
        %v463 = vmul.f32 %v462, 1.442695
        %v464 = vpow.pop %v463
        %v465 = vsel %vm384, %v464, 0.0
        %466 = vadd.xlane.f32.xlu0 %v465
        %v467 = vpop.xlane.xlu0 %466
        %468 = vrot.lane.b32.xlu0 %v372, 64
        %v469 = vpop.permute.xlu0 %468
        %v472 = vsel %vm384, %v464, 0
        %474 = vmatprep.subr.mxu0 0.0
        %475 = vmatpush1.msra.mxu0 0.0
        %476 = vmatprep.subr.mxu0 0.0
        %477 = vmatpush1.msra.mxu0 0.0
        %478 = vmatprep.subr.mxu0 0.0
        %479 = vmatpush1.msra.mxu0 0.0
        %480 = vmatprep.subr.mxu0 0.0
        %481 = vmatpush1.msra.mxu0 0.0
        %482 = vmatprep.subr.mxu0 0.0
        %483 = vmatpush1.msra.mxu0 0.0
        %484 = vmatprep.subr.mxu0 0.0
        %485 = vmatpush1.msra.mxu0 0.0
        %486 = vmatprep.subr.mxu0 0.0
        %487 = vmatpush1.msra.mxu0 0.0
        %488 = vmatprep.subr.mxu0 0.0
        %489 = vmatpush1.msra.mxu0 0.0
        %490 = vmatprep.subr.mxu0 0.0
        %491 = vmatpush1.msra.mxu0 0.0
        %492 = vmatprep.subr.mxu0 0.0
        %493 = vmatpush1.msra.mxu0 0.0
        %494 = vmatprep.subr.mxu0 0.0
        %495 = vmatpush1.msra.mxu0 0.0
        %496 = vmatprep.subr.mxu0 0.0
        %497 = vmatpush1.msra.mxu0 0.0
        %498 = vmatprep.subr.mxu0 0.0
        %499 = vmatpush1.msra.mxu0 0.0
        %500 = vmatprep.subr.mxu0 0.0
        %501 = vmatpush1.msra.mxu0 0.0
        %502 = vmatprep.subr.mxu0 0.0
        %503 = vmatpush1.msra.mxu0 0.0
        %504 = vmatprep.subr.mxu0 0.0
        %505 = vmatpush1.msra.mxu0 %v469
        %506 = vmatprep.subr.mxu0 0.0
        %507 = vmatpush2.msra.mxu0 0.0
        %508 = vmatprep.subr.mxu0 0.0
        %509 = vmatpush2.msra.mxu0 0.0
        %510 = vmatprep.subr.mxu0 0.0
        %511 = vmatpush2.msra.mxu0 0.0
        %512 = vmatprep.subr.mxu0 0.0
        %513 = vmatpush2.msra.mxu0 0.0
        %514 = vmatprep.subr.mxu0 0.0
        %515 = vmatpush2.msra.mxu0 0.0
        %516 = vmatprep.subr.mxu0 0.0
        %517 = vmatpush2.msra.mxu0 0.0
        %518 = vmatprep.subr.mxu0 0.0
        %519 = vmatpush2.msra.mxu0 0.0
        %520 = vmatprep.subr.mxu0 0.0
        %521 = vmatpush2.msra.mxu0 0.0
        %522 = vmatprep.subr.mxu0 0.0
        %523 = vmatpush2.msra.mxu0 0.0
        %524 = vmatprep.subr.mxu0 0.0
        %525 = vmatpush2.msra.mxu0 0.0
        %526 = vmatprep.subr.mxu0 0.0
        %527 = vmatpush2.msra.mxu0 0.0
        %528 = vmatprep.subr.mxu0 0.0
        %529 = vmatpush2.msra.mxu0 0.0
        %530 = vmatprep.subr.mxu0 0.0
        %531 = vmatpush2.msra.mxu0 0.0
        %532 = vmatprep.subr.mxu0 0.0
        %533 = vmatpush2.msra.mxu0 0.0
        %534 = vmatprep.subr.mxu0 0.0
        %535 = vmatpush2.msra.mxu0 0.0
        %536 = vmatprep.subr.mxu0 0.0
        %537 = vmatpush2.msra.mxu0 0.0
        %538 = vmatprep.mubr.f32.mxu0 0.0
        %539 = vmatmul.mubr.f32.gmra.mxu0 %v472
        %v540 = vpop.f32.mrf.mxu0
        %v541 = vadd.f32 0.0, %v540
        %v542 = vpop.f32.mrf.mxu0
        %543 = vdwg.mxu0
        %v544 = vrcp.pop %v467
        %v545 = vmul.f32 %v541, %v544
        %546 = vst.msk [vmem:[#allocation3] sm:$0xff] %vm384, %v545
        %547 = vrot.lane.b32.xlu0 %v372, 120
        %v548 = vpop.permute.xlu0 %547
        %549 = vrot.lane.b32.xlu0 %v372, 88
        %v550 = vpop.permute.xlu0 %549
        %v551 = vsel %vm384, %v548, 0
        %v553 = vsel %vm384, %v550, 0
        %555 = vmatprep.subr.mxu0 0.0
        %556 = vmatpush1.xpose.msra.mxu0 0.0
        %557 = vmatprep.subr.mxu0 0.0
        %558 = vmatpush1.xpose.msra.mxu0 0.0
        %559 = vmatprep.subr.mxu0 0.0
        %560 = vmatpush1.xpose.msra.mxu0 0.0
        %561 = vmatprep.subr.mxu0 0.0
        %562 = vmatpush1.xpose.msra.mxu0 0.0
        %563 = vmatprep.subr.mxu0 0.0
        %564 = vmatpush1.xpose.msra.mxu0 0.0
        %565 = vmatprep.subr.mxu0 0.0
        %566 = vmatpush1.xpose.msra.mxu0 0.0
        %567 = vmatprep.subr.mxu0 0.0
        %568 = vmatpush1.xpose.msra.mxu0 0.0
        %569 = vmatprep.subr.mxu0 0.0
        %570 = vmatpush1.xpose.msra.mxu0 0.0
        %571 = vmatprep.subr.mxu0 0.0
        %572 = vmatpush1.xpose.msra.mxu0 0.0
        %573 = vmatprep.subr.mxu0 0.0
        %574 = vmatpush1.xpose.msra.mxu0 0.0
        %575 = vmatprep.subr.mxu0 0.0
        %576 = vmatpush1.xpose.msra.mxu0 0.0
        %577 = vmatprep.subr.mxu0 0.0
        %578 = vmatpush1.xpose.msra.mxu0 0.0
        %579 = vmatprep.subr.mxu0 0.0
        %580 = vmatpush1.xpose.msra.mxu0 0.0
        %581 = vmatprep.subr.mxu0 0.0
        %582 = vmatpush1.xpose.msra.mxu0 0.0
        %583 = vmatprep.subr.mxu0 0.0
        %584 = vmatpush1.xpose.msra.mxu0 0.0
        %585 = vmatprep.subr.mxu0 0.0
        %586 = vmatpush1.xpose.msra.mxu0 %v553
        %587 = vmatprep.subr.mxu0 0.0
        %588 = vmatpush2.xpose.msra.mxu0 0.0
        %589 = vmatprep.subr.mxu0 0.0
        %590 = vmatpush2.xpose.msra.mxu0 0.0
        %591 = vmatprep.subr.mxu0 0.0
        %592 = vmatpush2.xpose.msra.mxu0 0.0
        %593 = vmatprep.subr.mxu0 0.0
        %594 = vmatpush2.xpose.msra.mxu0 0.0
        %595 = vmatprep.subr.mxu0 0.0
        %596 = vmatpush2.xpose.msra.mxu0 0.0
        %597 = vmatprep.subr.mxu0 0.0
        %598 = vmatpush2.xpose.msra.mxu0 0.0
        %599 = vmatprep.subr.mxu0 0.0
        %600 = vmatpush2.xpose.msra.mxu0 0.0
        %601 = vmatprep.subr.mxu0 0.0
        %602 = vmatpush2.xpose.msra.mxu0 0.0
        %603 = vmatprep.subr.mxu0 0.0
        %604 = vmatpush2.xpose.msra.mxu0 0.0
        %605 = vmatprep.subr.mxu0 0.0
        %606 = vmatpush2.xpose.msra.mxu0 0.0
        %607 = vmatprep.subr.mxu0 0.0
        %608 = vmatpush2.xpose.msra.mxu0 0.0
        %609 = vmatprep.subr.mxu0 0.0
        %610 = vmatpush2.xpose.msra.mxu0 0.0
        %611 = vmatprep.subr.mxu0 0.0
        %612 = vmatpush2.xpose.msra.mxu0 0.0
        %613 = vmatprep.subr.mxu0 0.0
        %614 = vmatpush2.xpose.msra.mxu0 0.0
        %615 = vmatprep.subr.mxu0 0.0
        %616 = vmatpush2.xpose.msra.mxu0 0.0
        %617 = vmatprep.subr.mxu0 0.0
        %618 = vmatpush2.xpose.msra.mxu0 0.0
        %619 = vmatprep.mubr.f32.mxu0 0.0
        %620 = vmatmul.mubr.f32.gmra.mxu0 %v551
        %v621 = vpop.f32.mrf.mxu0
        %v622 = vadd.f32 %v380, %v621
        %v623 = vpop.f32.mrf.mxu0
        %624 = vdwg.mxu0
        %v625 = vsel %vm384, %v622, -inf
        %626 = vmax.xlane.f32.xlu0 %v625
        %v627 = vpop.xlane.xlu0 %626
        %v628 = vsub.f32 %v622, %v627
        %v629 = vmul.f32 %v628, 1.442695
        %v630 = vpow.pop %v629
        %v631 = vsel %vm384, %v630, 0.0
        %632 = vadd.xlane.f32.xlu0 %v631
        %v633 = vpop.xlane.xlu0 %632
        %634 = vrot.lane.b32.xlu0 %v372, 56
        %v635 = vpop.permute.xlu0 %634
        %v638 = vsel %vm384, %v630, 0
        %640 = vmatprep.subr.mxu0 0.0
        %641 = vmatpush1.msra.mxu0 0.0
        %642 = vmatprep.subr.mxu0 0.0
        %643 = vmatpush1.msra.mxu0 0.0
        %644 = vmatprep.subr.mxu0 0.0
        %645 = vmatpush1.msra.mxu0 0.0
        %646 = vmatprep.subr.mxu0 0.0
        %647 = vmatpush1.msra.mxu0 0.0
        %648 = vmatprep.subr.mxu0 0.0
        %649 = vmatpush1.msra.mxu0 0.0
        %650 = vmatprep.subr.mxu0 0.0
        %651 = vmatpush1.msra.mxu0 0.0
        %652 = vmatprep.subr.mxu0 0.0
        %653 = vmatpush1.msra.mxu0 0.0
        %654 = vmatprep.subr.mxu0 0.0
        %655 = vmatpush1.msra.mxu0 0.0
        %656 = vmatprep.subr.mxu0 0.0
        %657 = vmatpush1.msra.mxu0 0.0
        %658 = vmatprep.subr.mxu0 0.0
        %659 = vmatpush1.msra.mxu0 0.0
        %660 = vmatprep.subr.mxu0 0.0
        %661 = vmatpush1.msra.mxu0 0.0
        %662 = vmatprep.subr.mxu0 0.0
        %663 = vmatpush1.msra.mxu0 0.0
        %664 = vmatprep.subr.mxu0 0.0
        %665 = vmatpush1.msra.mxu0 0.0
        %666 = vmatprep.subr.mxu0 0.0
        %667 = vmatpush1.msra.mxu0 0.0
        %668 = vmatprep.subr.mxu0 0.0
        %669 = vmatpush1.msra.mxu0 0.0
        %670 = vmatprep.subr.mxu0 0.0
        %671 = vmatpush1.msra.mxu0 %v635
        %672 = vmatprep.subr.mxu0 0.0
        %673 = vmatpush2.msra.mxu0 0.0
        %674 = vmatprep.subr.mxu0 0.0
        %675 = vmatpush2.msra.mxu0 0.0
        %676 = vmatprep.subr.mxu0 0.0
        %677 = vmatpush2.msra.mxu0 0.0
        %678 = vmatprep.subr.mxu0 0.0
        %679 = vmatpush2.msra.mxu0 0.0
        %680 = vmatprep.subr.mxu0 0.0
        %681 = vmatpush2.msra.mxu0 0.0
        %682 = vmatprep.subr.mxu0 0.0
        %683 = vmatpush2.msra.mxu0 0.0
        %684 = vmatprep.subr.mxu0 0.0
        %685 = vmatpush2.msra.mxu0 0.0
        %686 = vmatprep.subr.mxu0 0.0
        %687 = vmatpush2.msra.mxu0 0.0
        %688 = vmatprep.subr.mxu0 0.0
        %689 = vmatpush2.msra.mxu0 0.0
        %690 = vmatprep.subr.mxu0 0.0
        %691 = vmatpush2.msra.mxu0 0.0
        %692 = vmatprep.subr.mxu0 0.0
        %693 = vmatpush2.msra.mxu0 0.0
        %694 = vmatprep.subr.mxu0 0.0
        %695 = vmatpush2.msra.mxu0 0.0
        %696 = vmatprep.subr.mxu0 0.0
        %697 = vmatpush2.msra.mxu0 0.0
        %698 = vmatprep.subr.mxu0 0.0
        %699 = vmatpush2.msra.mxu0 0.0
        %700 = vmatprep.subr.mxu0 0.0
        %701 = vmatpush2.msra.mxu0 0.0
        %702 = vmatprep.subr.mxu0 0.0
        %703 = vmatpush2.msra.mxu0 0.0
        %704 = vmatprep.mubr.f32.mxu0 0.0
        %705 = vmatmul.mubr.f32.gmra.mxu0 %v638
        %v706 = vpop.f32.mrf.mxu0
        %v707 = vadd.f32 0.0, %v706
        %v708 = vpop.f32.mrf.mxu0
        %709 = vdwg.mxu0
        %v710 = vrcp.pop %v633
        %v711 = vmul.f32 %v707, %v710
        %713 = vrot.lane.b32.xlu0 %v711, 8
        %v714 = vpop.permute.xlu0 %713
        %vm716 = vcmask 130112
        %717 = vst.msk [vmem:[#allocation3] sm:$0xff] %vm716, %v714
        %718 = vrot.lane.b32.xlu0 %v372, 112
        %v719 = vpop.permute.xlu0 %718
        %720 = vrot.lane.b32.xlu0 %v372, 80
        %v721 = vpop.permute.xlu0 %720
        %v722 = vsel %vm384, %v719, 0
        %v724 = vsel %vm384, %v721, 0
        %726 = vmatprep.subr.mxu0 0.0
        %727 = vmatpush1.xpose.msra.mxu0 0.0
        %728 = vmatprep.subr.mxu0 0.0
        %729 = vmatpush1.xpose.msra.mxu0 0.0
        %730 = vmatprep.subr.mxu0 0.0
        %731 = vmatpush1.xpose.msra.mxu0 0.0
        %732 = vmatprep.subr.mxu0 0.0
        %733 = vmatpush1.xpose.msra.mxu0 0.0
        %734 = vmatprep.subr.mxu0 0.0
        %735 = vmatpush1.xpose.msra.mxu0 0.0
        %736 = vmatprep.subr.mxu0 0.0
        %737 = vmatpush1.xpose.msra.mxu0 0.0
        %738 = vmatprep.subr.mxu0 0.0
        %739 = vmatpush1.xpose.msra.mxu0 0.0
        %740 = vmatprep.subr.mxu0 0.0
        %741 = vmatpush1.xpose.msra.mxu0 0.0
        %742 = vmatprep.subr.mxu0 0.0
        %743 = vmatpush1.xpose.msra.mxu0 0.0
        %744 = vmatprep.subr.mxu0 0.0
        %745 = vmatpush1.xpose.msra.mxu0 0.0
        %746 = vmatprep.subr.mxu0 0.0
        %747 = vmatpush1.xpose.msra.mxu0 0.0
        %748 = vmatprep.subr.mxu0 0.0
        %749 = vmatpush1.xpose.msra.mxu0 0.0
        %750 = vmatprep.subr.mxu0 0.0
        %751 = vmatpush1.xpose.msra.mxu0 0.0
        %752 = vmatprep.subr.mxu0 0.0
        %753 = vmatpush1.xpose.msra.mxu0 0.0
        %754 = vmatprep.subr.mxu0 0.0
        %755 = vmatpush1.xpose.msra.mxu0 0.0
        %756 = vmatprep.subr.mxu0 0.0
        %757 = vmatpush1.xpose.msra.mxu0 %v724
        %758 = vmatprep.subr.mxu0 0.0
        %759 = vmatpush2.xpose.msra.mxu0 0.0
        %760 = vmatprep.subr.mxu0 0.0
        %761 = vmatpush2.xpose.msra.mxu0 0.0
        %762 = vmatprep.subr.mxu0 0.0
        %763 = vmatpush2.xpose.msra.mxu0 0.0
        %764 = vmatprep.subr.mxu0 0.0
        %765 = vmatpush2.xpose.msra.mxu0 0.0
        %766 = vmatprep.subr.mxu0 0.0
        %767 = vmatpush2.xpose.msra.mxu0 0.0
        %768 = vmatprep.subr.mxu0 0.0
        %769 = vmatpush2.xpose.msra.mxu0 0.0
        %770 = vmatprep.subr.mxu0 0.0
        %771 = vmatpush2.xpose.msra.mxu0 0.0
        %772 = vmatprep.subr.mxu0 0.0
        %773 = vmatpush2.xpose.msra.mxu0 0.0
        %774 = vmatprep.subr.mxu0 0.0
        %775 = vmatpush2.xpose.msra.mxu0 0.0
        %776 = vmatprep.subr.mxu0 0.0
        %777 = vmatpush2.xpose.msra.mxu0 0.0
        %778 = vmatprep.subr.mxu0 0.0
        %779 = vmatpush2.xpose.msra.mxu0 0.0
        %780 = vmatprep.subr.mxu0 0.0
        %781 = vmatpush2.xpose.msra.mxu0 0.0
        %782 = vmatprep.subr.mxu0 0.0
        %783 = vmatpush2.xpose.msra.mxu0 0.0
        %784 = vmatprep.subr.mxu0 0.0
        %785 = vmatpush2.xpose.msra.mxu0 0.0
        %786 = vmatprep.subr.mxu0 0.0
        %787 = vmatpush2.xpose.msra.mxu0 0.0
        %788 = vmatprep.subr.mxu0 0.0
        %789 = vmatpush2.xpose.msra.mxu0 0.0
        %790 = vmatprep.mubr.f32.mxu0 0.0
        %791 = vmatmul.mubr.f32.gmra.mxu0 %v722
        %v792 = vpop.f32.mrf.mxu0
        %v793 = vadd.f32 %v380, %v792
        %v794 = vpop.f32.mrf.mxu0
        %795 = vdwg.mxu0
        %v796 = vsel %vm384, %v793, -inf
        %797 = vmax.xlane.f32.xlu0 %v796
        %v798 = vpop.xlane.xlu0 %797
        %v799 = vsub.f32 %v793, %v798
        %v800 = vmul.f32 %v799, 1.442695
        %v801 = vpow.pop %v800
        %v802 = vsel %vm384, %v801, 0.0
        %803 = vadd.xlane.f32.xlu0 %v802
        %v804 = vpop.xlane.xlu0 %803
        %805 = vrot.lane.b32.xlu0 %v372, 48
        %v806 = vpop.permute.xlu0 %805
        %v809 = vsel %vm384, %v801, 0
        %811 = vmatprep.subr.mxu0 0.0
        %812 = vmatpush1.msra.mxu0 0.0
        %813 = vmatprep.subr.mxu0 0.0
        %814 = vmatpush1.msra.mxu0 0.0
        %815 = vmatprep.subr.mxu0 0.0
        %816 = vmatpush1.msra.mxu0 0.0
        %817 = vmatprep.subr.mxu0 0.0
        %818 = vmatpush1.msra.mxu0 0.0
        %819 = vmatprep.subr.mxu0 0.0
        %820 = vmatpush1.msra.mxu0 0.0
        %821 = vmatprep.subr.mxu0 0.0
        %822 = vmatpush1.msra.mxu0 0.0
        %823 = vmatprep.subr.mxu0 0.0
        %824 = vmatpush1.msra.mxu0 0.0
        %825 = vmatprep.subr.mxu0 0.0
        %826 = vmatpush1.msra.mxu0 0.0
        %827 = vmatprep.subr.mxu0 0.0
        %828 = vmatpush1.msra.mxu0 0.0
        %829 = vmatprep.subr.mxu0 0.0
        %830 = vmatpush1.msra.mxu0 0.0
        %831 = vmatprep.subr.mxu0 0.0
        %832 = vmatpush1.msra.mxu0 0.0
        %833 = vmatprep.subr.mxu0 0.0
        %834 = vmatpush1.msra.mxu0 0.0
        %835 = vmatprep.subr.mxu0 0.0
        %836 = vmatpush1.msra.mxu0 0.0
        %837 = vmatprep.subr.mxu0 0.0
        %838 = vmatpush1.msra.mxu0 0.0
        %839 = vmatprep.subr.mxu0 0.0
        %840 = vmatpush1.msra.mxu0 0.0
        %841 = vmatprep.subr.mxu0 0.0
        %842 = vmatpush1.msra.mxu0 %v806
        %843 = vmatprep.subr.mxu0 0.0
        %844 = vmatpush2.msra.mxu0 0.0
        %845 = vmatprep.subr.mxu0 0.0
        %846 = vmatpush2.msra.mxu0 0.0
        %847 = vmatprep.subr.mxu0 0.0
        %848 = vmatpush2.msra.mxu0 0.0
        %849 = vmatprep.subr.mxu0 0.0
        %850 = vmatpush2.msra.mxu0 0.0
        %851 = vmatprep.subr.mxu0 0.0
        %852 = vmatpush2.msra.mxu0 0.0
        %853 = vmatprep.subr.mxu0 0.0
        %854 = vmatpush2.msra.mxu0 0.0
        %855 = vmatprep.subr.mxu0 0.0
        %856 = vmatpush2.msra.mxu0 0.0
        %857 = vmatprep.subr.mxu0 0.0
        %858 = vmatpush2.msra.mxu0 0.0
        %859 = vmatprep.subr.mxu0 0.0
        %860 = vmatpush2.msra.mxu0 0.0
        %861 = vmatprep.subr.mxu0 0.0
        %862 = vmatpush2.msra.mxu0 0.0
        %863 = vmatprep.subr.mxu0 0.0
        %864 = vmatpush2.msra.mxu0 0.0
        %865 = vmatprep.subr.mxu0 0.0
        %866 = vmatpush2.msra.mxu0 0.0
        %867 = vmatprep.subr.mxu0 0.0
        %868 = vmatpush2.msra.mxu0 0.0
        %869 = vmatprep.subr.mxu0 0.0
        %870 = vmatpush2.msra.mxu0 0.0
        %871 = vmatprep.subr.mxu0 0.0
        %872 = vmatpush2.msra.mxu0 0.0
        %873 = vmatprep.subr.mxu0 0.0
        %874 = vmatpush2.msra.mxu0 0.0
        %875 = vmatprep.mubr.f32.mxu0 0.0
        %876 = vmatmul.mubr.f32.gmra.mxu0 %v809
        %v877 = vpop.f32.mrf.mxu0
        %v878 = vadd.f32 0.0, %v877
        %v879 = vpop.f32.mrf.mxu0
        %880 = vdwg.mxu0
        %v881 = vrcp.pop %v804
        %v882 = vmul.f32 %v878, %v881
        %884 = vrot.lane.b32.xlu0 %v882, 16
        %v885 = vpop.permute.xlu0 %884
        %vm887 = vcmask 195712
        %888 = vst.msk [vmem:[#allocation3] sm:$0xff] %vm887, %v885
        %889 = vrot.lane.b32.xlu0 %v372, 104
        %v890 = vpop.permute.xlu0 %889
        %891 = vrot.lane.b32.xlu0 %v372, 72
        %v892 = vpop.permute.xlu0 %891
        %v893 = vsel %vm384, %v890, 0
        %v895 = vsel %vm384, %v892, 0
        %897 = vmatprep.subr.mxu0 0.0
        %898 = vmatpush1.xpose.msra.mxu0 0.0
        %899 = vmatprep.subr.mxu0 0.0
        %900 = vmatpush1.xpose.msra.mxu0 0.0
        %901 = vmatprep.subr.mxu0 0.0
        %902 = vmatpush1.xpose.msra.mxu0 0.0
        %903 = vmatprep.subr.mxu0 0.0
        %904 = vmatpush1.xpose.msra.mxu0 0.0
        %905 = vmatprep.subr.mxu0 0.0
        %906 = vmatpush1.xpose.msra.mxu0 0.0
        %907 = vmatprep.subr.mxu0 0.0
        %908 = vmatpush1.xpose.msra.mxu0 0.0
        %909 = vmatprep.subr.mxu0 0.0
        %910 = vmatpush1.xpose.msra.mxu0 0.0
        %911 = vmatprep.subr.mxu0 0.0
        %912 = vmatpush1.xpose.msra.mxu0 0.0
        %913 = vmatprep.subr.mxu0 0.0
        %914 = vmatpush1.xpose.msra.mxu0 0.0
        %915 = vmatprep.subr.mxu0 0.0
        %916 = vmatpush1.xpose.msra.mxu0 0.0
        %917 = vmatprep.subr.mxu0 0.0
        %918 = vmatpush1.xpose.msra.mxu0 0.0
        %919 = vmatprep.subr.mxu0 0.0
        %920 = vmatpush1.xpose.msra.mxu0 0.0
        %921 = vmatprep.subr.mxu0 0.0
        %922 = vmatpush1.xpose.msra.mxu0 0.0
        %923 = vmatprep.subr.mxu0 0.0
        %924 = vmatpush1.xpose.msra.mxu0 0.0
        %925 = vmatprep.subr.mxu0 0.0
        %926 = vmatpush1.xpose.msra.mxu0 0.0
        %927 = vmatprep.subr.mxu0 0.0
        %928 = vmatpush1.xpose.msra.mxu0 %v895
        %929 = vmatprep.subr.mxu0 0.0
        %930 = vmatpush2.xpose.msra.mxu0 0.0
        %931 = vmatprep.subr.mxu0 0.0
        %932 = vmatpush2.xpose.msra.mxu0 0.0
        %933 = vmatprep.subr.mxu0 0.0
        %934 = vmatpush2.xpose.msra.mxu0 0.0
        %935 = vmatprep.subr.mxu0 0.0
        %936 = vmatpush2.xpose.msra.mxu0 0.0
        %937 = vmatprep.subr.mxu0 0.0
        %938 = vmatpush2.xpose.msra.mxu0 0.0
        %939 = vmatprep.subr.mxu0 0.0
        %940 = vmatpush2.xpose.msra.mxu0 0.0
        %941 = vmatprep.subr.mxu0 0.0
        %942 = vmatpush2.xpose.msra.mxu0 0.0
        %943 = vmatprep.subr.mxu0 0.0
        %944 = vmatpush2.xpose.msra.mxu0 0.0
        %945 = vmatprep.subr.mxu0 0.0
        %946 = vmatpush2.xpose.msra.mxu0 0.0
        %947 = vmatprep.subr.mxu0 0.0
        %948 = vmatpush2.xpose.msra.mxu0 0.0
        %949 = vmatprep.subr.mxu0 0.0
        %950 = vmatpush2.xpose.msra.mxu0 0.0
        %951 = vmatprep.subr.mxu0 0.0
        %952 = vmatpush2.xpose.msra.mxu0 0.0
        %953 = vmatprep.subr.mxu0 0.0
        %954 = vmatpush2.xpose.msra.mxu0 0.0
        %955 = vmatprep.subr.mxu0 0.0
        %956 = vmatpush2.xpose.msra.mxu0 0.0
        %957 = vmatprep.subr.mxu0 0.0
        %958 = vmatpush2.xpose.msra.mxu0 0.0
        %959 = vmatprep.subr.mxu0 0.0
        %960 = vmatpush2.xpose.msra.mxu0 0.0
        %961 = vmatprep.mubr.f32.mxu0 0.0
        %962 = vmatmul.mubr.f32.gmra.mxu0 %v893
        %v963 = vpop.f32.mrf.mxu0
        %v964 = vadd.f32 %v380, %v963
        %v965 = vpop.f32.mrf.mxu0
        %966 = vdwg.mxu0
        %v967 = vsel %vm384, %v964, -inf
        %968 = vmax.xlane.f32.xlu0 %v967
        %v969 = vpop.xlane.xlu0 %968
        %v970 = vsub.f32 %v964, %v969
        %v971 = vmul.f32 %v970, 1.442695
        %v972 = vpow.pop %v971
        %v973 = vsel %vm384, %v972, 0.0
        %974 = vadd.xlane.f32.xlu0 %v973
        %v975 = vpop.xlane.xlu0 %974
        %976 = vrot.lane.b32.xlu0 %v372, 40
        %v977 = vpop.permute.xlu0 %976
        %v980 = vsel %vm384, %v972, 0
        %982 = vmatprep.subr.mxu0 0.0
        %983 = vmatpush1.msra.mxu0 0.0
        %984 = vmatprep.subr.mxu0 0.0
        %985 = vmatpush1.msra.mxu0 0.0
        %986 = vmatprep.subr.mxu0 0.0
        %987 = vmatpush1.msra.mxu0 0.0
        %988 = vmatprep.subr.mxu0 0.0
        %989 = vmatpush1.msra.mxu0 0.0
        %990 = vmatprep.subr.mxu0 0.0
        %991 = vmatpush1.msra.mxu0 0.0
        %992 = vmatprep.subr.mxu0 0.0
        %993 = vmatpush1.msra.mxu0 0.0
        %994 = vmatprep.subr.mxu0 0.0
        %995 = vmatpush1.msra.mxu0 0.0
        %996 = vmatprep.subr.mxu0 0.0
        %997 = vmatpush1.msra.mxu0 0.0
        %998 = vmatprep.subr.mxu0 0.0
        %999 = vmatpush1.msra.mxu0 0.0
        %1000 = vmatprep.subr.mxu0 0.0
        %1001 = vmatpush1.msra.mxu0 0.0
        %1002 = vmatprep.subr.mxu0 0.0
        %1003 = vmatpush1.msra.mxu0 0.0
        %1004 = vmatprep.subr.mxu0 0.0
        %1005 = vmatpush1.msra.mxu0 0.0
        %1006 = vmatprep.subr.mxu0 0.0
        %1007 = vmatpush1.msra.mxu0 0.0
        %1008 = vmatprep.subr.mxu0 0.0
        %1009 = vmatpush1.msra.mxu0 0.0
        %1010 = vmatprep.subr.mxu0 0.0
        %1011 = vmatpush1.msra.mxu0 0.0
        %1012 = vmatprep.subr.mxu0 0.0
        %1013 = vmatpush1.msra.mxu0 %v977
        %1014 = vmatprep.subr.mxu0 0.0
        %1015 = vmatpush2.msra.mxu0 0.0
        %1016 = vmatprep.subr.mxu0 0.0
        %1017 = vmatpush2.msra.mxu0 0.0
        %1018 = vmatprep.subr.mxu0 0.0
        %1019 = vmatpush2.msra.mxu0 0.0
        %1020 = vmatprep.subr.mxu0 0.0
        %1021 = vmatpush2.msra.mxu0 0.0
        %1022 = vmatprep.subr.mxu0 0.0
        %1023 = vmatpush2.msra.mxu0 0.0
        %1024 = vmatprep.subr.mxu0 0.0
        %1025 = vmatpush2.msra.mxu0 0.0
        %1026 = vmatprep.subr.mxu0 0.0
        %1027 = vmatpush2.msra.mxu0 0.0
        %1028 = vmatprep.subr.mxu0 0.0
        %1029 = vmatpush2.msra.mxu0 0.0
        %1030 = vmatprep.subr.mxu0 0.0
        %1031 = vmatpush2.msra.mxu0 0.0
        %1032 = vmatprep.subr.mxu0 0.0
        %1033 = vmatpush2.msra.mxu0 0.0
        %1034 = vmatprep.subr.mxu0 0.0
        %1035 = vmatpush2.msra.mxu0 0.0
        %1036 = vmatprep.subr.mxu0 0.0
        %1037 = vmatpush2.msra.mxu0 0.0
        %1038 = vmatprep.subr.mxu0 0.0
        %1039 = vmatpush2.msra.mxu0 0.0
        %1040 = vmatprep.subr.mxu0 0.0
        %1041 = vmatpush2.msra.mxu0 0.0
        %1042 = vmatprep.subr.mxu0 0.0
        %1043 = vmatpush2.msra.mxu0 0.0
        %1044 = vmatprep.subr.mxu0 0.0
        %1045 = vmatpush2.msra.mxu0 0.0
        %1046 = vmatprep.mubr.f32.mxu0 0.0
        %1047 = vmatmul.mubr.f32.gmra.mxu0 %v980
        %v1048 = vpop.f32.mrf.mxu0
        %v1049 = vadd.f32 0.0, %v1048
        %v1050 = vpop.f32.mrf.mxu0
        %1051 = vdwg.mxu0
        %v1052 = vrcp.pop %v975
        %v1053 = vmul.f32 %v1049, %v1052
        %1055 = vrot.lane.b32.xlu0 %v1053, 24
        %v1056 = vpop.permute.xlu0 %1055
        %vm1058 = vcmask 261312
        %1059 = vst.msk [vmem:[#allocation3] sm:$0xff] %vm1058, %v1056
        %v1060 = vld [vmem:[#allocation3] sm:$0xff]
        %v1062 = vsel %vm301, %v1060, 0
        %1064 = vmatprep.subr.mxu0 0.0
        %1065 = vmatpush1.msra.mxu0 0.0
        %1066 = vmatprep.subr.mxu0 0.0
        %1067 = vmatpush1.msra.mxu0 0.0
        %1068 = vmatprep.subr.mxu0 0.0
        %1069 = vmatpush1.msra.mxu0 0.0
        %1070 = vmatprep.subr.mxu0 0.0
        %1071 = vmatpush1.msra.mxu0 0.0
        %1072 = vmatprep.subr.mxu0 0.0
        %1073 = vmatpush1.msra.mxu0 0.0
        %1074 = vmatprep.subr.mxu0 0.0
        %1075 = vmatpush1.msra.mxu0 0.0
        %1076 = vmatprep.subr.mxu0 0.0
        %1077 = vmatpush1.msra.mxu0 0.0
        %1078 = vmatprep.subr.mxu0 0.0
        %1079 = vmatpush1.msra.mxu0 0.0
        %1080 = vmatprep.subr.mxu0 0.0
        %1081 = vmatpush1.msra.mxu0 0.0
        %1082 = vmatprep.subr.mxu0 0.0
        %1083 = vmatpush1.msra.mxu0 0.0
        %1084 = vmatprep.subr.mxu0 0.0
        %1085 = vmatpush1.msra.mxu0 0.0
        %1086 = vmatprep.subr.mxu0 0.0
        %1087 = vmatpush1.msra.mxu0 0.0
        %1088 = vmatprep.subr.mxu0 0.0
        %1089 = vmatpush1.msra.mxu0 %v291
        %1090 = vmatprep.subr.mxu0 0.0
        %1091 = vmatpush1.msra.mxu0 %v290
        %1092 = vmatprep.subr.mxu0 0.0
        %1093 = vmatpush1.msra.mxu0 %v289
        %1094 = vmatprep.subr.mxu0 0.0
        %1095 = vmatpush1.msra.mxu0 %v288
        %1096 = vmatprep.subr.mxu0 0.0
        %1097 = vmatpush2.msra.mxu0 0.0
        %1098 = vmatprep.subr.mxu0 0.0
        %1099 = vmatpush2.msra.mxu0 0.0
        %1100 = vmatprep.subr.mxu0 0.0
        %1101 = vmatpush2.msra.mxu0 0.0
        %1102 = vmatprep.subr.mxu0 0.0
        %1103 = vmatpush2.msra.mxu0 0.0
        %1104 = vmatprep.subr.mxu0 0.0
        %1105 = vmatpush2.msra.mxu0 0.0
        %1106 = vmatprep.subr.mxu0 0.0
        %1107 = vmatpush2.msra.mxu0 0.0
        %1108 = vmatprep.subr.mxu0 0.0
        %1109 = vmatpush2.msra.mxu0 0.0
        %1110 = vmatprep.subr.mxu0 0.0
        %1111 = vmatpush2.msra.mxu0 0.0
        %1112 = vmatprep.subr.mxu0 0.0
        %1113 = vmatpush2.msra.mxu0 0.0
        %1114 = vmatprep.subr.mxu0 0.0
        %1115 = vmatpush2.msra.mxu0 0.0
        %1116 = vmatprep.subr.mxu0 0.0
        %1117 = vmatpush2.msra.mxu0 0.0
        %1118 = vmatprep.subr.mxu0 0.0
        %1119 = vmatpush2.msra.mxu0 0.0
        %1120 = vmatprep.subr.mxu0 0.0
        %1121 = vmatpush2.msra.mxu0 0.0
        %1122 = vmatprep.subr.mxu0 0.0
        %1123 = vmatpush2.msra.mxu0 0.0
        %1124 = vmatprep.subr.mxu0 0.0
        %1125 = vmatpush2.msra.mxu0 0.0
        %1126 = vmatprep.subr.mxu0 0.0
        %1127 = vmatpush2.msra.mxu0 0.0
        %1128 = vmatprep.mubr.f32.mxu0 0.0
        %1129 = vmatmul.mubr.f32.gmra.mxu0 %v1062
        %v1130 = vpop.f32.mrf.mxu0
        %v1131 = vadd.f32 0.0, %v1130
        %v1132 = vpop.f32.mrf.mxu0
        %1133 = vdwg.mxu0
        %p1134 = scmp.eq.s32.totalorder %s28, 0
        // Predicated region
        $region53: #{tpu_custom_call.1} parent=39 // pred_check
          %p1135 = pneg %p1134
        $region54: #{tpu_custom_call.1} parent=39 // pred_check_branch
          %1137 = sbr.rel (%p1135) target = $region56
        $region55: #{tpu_custom_call.1} parent=39 // pred_region
          %v1138 = vld [vmem:[%s4] sm:$0x1]
          %v1140 = vlaneseq
          %v1141 = vshrl.u32 %v1140, 7
          %v1142 = vsub.s32 0, %v1141
          %v1143 = vrot.slane %v1138, %v1142
          %v1145 = vadd.f32 %v1131, %v1143
          %1146 = vst.msk [vmem:[#allocation2] sm:$0xff] %vm301, %v1145
        $region56: #{tpu_custom_call.1} parent=39 // pred_fallthru
          _
        %p1147 = scmp.ne.s32.totalorder %s28, 0
        // Predicated region
        $region57: #{tpu_custom_call.1} parent=39 // pred_check
          %p1148 = pneg %p1147
        $region58: #{tpu_custom_call.1} parent=39 // pred_check_branch
          %1150 = sbr.rel (%p1148) target = $region60
        $region59: #{tpu_custom_call.1} parent=39 // pred_region
          %v1151 = vld [vmem:[#allocation2] sm:$0xff]
          %v1152 = vadd.f32 %v1151, %v1131
          %1153 = vst.msk [vmem:[#allocation2] sm:$0xff] %vm301, %v1152
        $region60: #{tpu_custom_call.1} parent=39 // pred_fallthru
          _
        // Predicated region
        $region61: #{tpu_custom_call.1} parent=39 // pred_check
          %p1154 = pneg %p1134
        $region62: #{tpu_custom_call.1} parent=39 // pred_check_branch
          %1156 = sbr.rel (%p1154) target = $region64
        $region63: #{tpu_custom_call.1} parent=39 // pred_region
          %v1157 = vld [vmem:[#allocation2] sm:$0xff]
          %1158 = vst.msk [vmem:[%s280] sm:$0xff] %vm301, %v1157
        $region64: #{tpu_custom_call.1} parent=39 // pred_fallthru
          _
        %s1159 = sand.u32 %s153, 1
        %s1160 = scalar_lea.sflag [#allocation6], %s1159
        %s1161 = sand.u32 %s153, 1
        %s1162 = smul.addr %s1161, 8
        %s1163 = scalar_lea.vmem [#allocation10], %s1162
        // Predicated region
        $region65: #{tpu_custom_call.1} parent=39 // pred_check
          %p1164 = pneg %p163
        $region66: #{tpu_custom_call.1} parent=39 // pred_check_branch
          %1166 = sbr.rel (%p1164) target = $region68
        $region67: #{tpu_custom_call.1} parent=39 // pred_region
          %s1168 = ssub.s32 128, 128
          %1169 = vsyncadd %s1160, %s1168
          %s1170 = smul.addr %s27, 128
          %s1171 = scalar_lea.hbm %s5, %s1170
          %s1173 = sshll.u32 %s1163, 4
          %s1174 = int_to_ptr.vmem [resolvable:$true] %s1173
          %1176 = dma.vmem_to_hbm [thread:$0]  %s1174, 128, %s1171, %s1160
        $region68: #{tpu_custom_call.1} parent=39 // pred_fallthru
          _
      $region40: #{tpu_custom_call.1} parent=5 // pred_fallthru
        _
      %p1177 = scmp.le.s32.totalorder 2, %s18
      // Predicated region
      $region69: #{tpu_custom_call.1} parent=5 // pred_check
        %p1178 = pneg %p1177
      $region70: #{tpu_custom_call.1} parent=5 // pred_check_branch
        %1180 = sbr.rel (%p1178) target = $region72
      $region71: #{tpu_custom_call.1} parent=5 // pred_region
        %s1181 = ssub.s32 %s18, 2
        // Predicated region
        $region73: #{tpu_custom_call.1} parent=71 // pred_check
          %p1182 = pneg %p169
        $region74: #{tpu_custom_call.1} parent=71 // pred_check_branch
          %1184 = sbr.rel (%p1182) target = $region76
        $region75: #{tpu_custom_call.1} parent=71 // pred_region
          %s1185 = sand.u32 %s154, 1
          %s1186 = scalar_lea.sflag [#allocation6], %s1185
          %s1187 = sand.u32 %s154, 1
          %s1188 = smul.addr %s1187, 8
          %s1189 = scalar_lea.vmem [#allocation10], %s1188
          %1190 = dma.done %s1186, 128
        $region76: #{tpu_custom_call.1} parent=71 // pred_fallthru
          _
      $region72: #{tpu_custom_call.1} parent=5 // pred_fallthru
        _
    $region6: #{tpu_custom_call.1} parent=1 // loop_footer
      %s22 = sadd.s32 1, %s18
    $region7: #{tpu_custom_call.1} parent=1 // loop_footer_branch
      %17 = sbr.rel target = $region3
    $region8: #{tpu_custom_call.1} parent=1 // loop_exit
      _
    %1191 = vsyncpa [#allocation5], 1
    %s1192 = scalar_lea.sflag [#allocation5], 1
    %1193 = vsyncpa %s1192, 1
    %1194 = vsyncpa [#allocation8], 1
    %1195 = vsyncpa [#allocation6], 1
    %s1196 = scalar_lea.sflag [#allocation6], 1
    %1197 = vsyncpa %s1196, 1

</llo_original>
